<compile_context>
chip_gen: v6e
topology: v6e:2x2x1
jax: 0.10.0
libtpu: 0.0.40
codegen_flags: <defaults>
</compile_context>

<pallas_src>
import numpy as np
import jax
import jax.numpy as jnp
from jax.experimental import pallas as pl
from jax.experimental.pallas import tpu as pltpu  # noqa: F401  (TPU backend)


# ---------------------------------------------------------------------------
# Fused MHA kernel
# ---------------------------------------------------------------------------

def _make_mha_kernel(B, Lq, Lk, n_head, d_k, d_v, temperature, use_res, eps=1e-5):
    inv_temp = np.float32(1.0 / temperature)
    neg_big = np.float32(-10000000000.0)
    eps = np.float32(eps)

    def kernel(xq_ref, xk_ref, xv_ref, mask_ref,
               wq_ref, wk_ref, wv_ref, fcw_ref, fcb_ref, g_ref, b_ref,
               out_ref, attn_ref):
        xq = xq_ref[...]                       # (B*Lq, Dm)
        xk = xk_ref[...]                       # (B*Lk, Dm)
        xv = xv_ref[...]                       # (B*Lk, Dm)

        # --- fused projections: all batches x all heads, one MXU op each ---
        Q = jnp.dot(xq, wq_ref[...], preferred_element_type=jnp.float32)  # (B*Lq, H*dk)
        K = jnp.dot(xk, wk_ref[...], preferred_element_type=jnp.float32)  # (B*Lk, H*dk)
        V = jnp.dot(xv, wv_ref[...], preferred_element_type=jnp.float32)  # (B*Lk, H*dv)
        Q = Q * inv_temp                       # fold 1/temperature once

        o_rows = []      # per-batch (Lq, H*dv) head-concatenated outputs
        p_rows = []      # per-batch (Lq, H*Lk) head-concatenated attn probs
        for b in range(B):
            qb = Q[b * Lq:(b + 1) * Lq, :]
            kb = K[b * Lk:(b + 1) * Lk, :]
            vb = V[b * Lk:(b + 1) * Lk, :]
            mb = mask_ref[b] != 0              # (Lq, Lk); hoisted out of head loop
            o_heads = []
            p_heads = []
            for h in range(n_head):
                qh = qb[:, h * d_k:(h + 1) * d_k]
                kh = kb[:, h * d_k:(h + 1) * d_k]
                vh = vb[:, h * d_v:(h + 1) * d_v]
                # scores = (q / temperature) @ k^T ; masked_fill(mask, -1e10)
                s = jax.lax.dot_general(qh, kh, (((1,), (1,)), ((), ())),
                                        preferred_element_type=jnp.float32)
                s = jnp.where(mb, neg_big, s)
                # exact, numerically stable softmax along the key axis
                s = s - jnp.max(s, axis=-1, keepdims=True)
                e = jnp.exp(s)
                p = e / jnp.sum(e, axis=-1, keepdims=True)
                p_heads.append(p)
                o_heads.append(jnp.dot(p, vh, preferred_element_type=jnp.float32))
            o_rows.append(jnp.concatenate(o_heads, axis=-1))   # (Lq, H*dv)
            p_rows.append(jnp.concatenate(p_heads, axis=-1))   # (Lq, H*Lk)

        # single lane-dense store of all attention probabilities
        attn_ref[...] = jnp.concatenate(p_rows, axis=0)        # (B*Lq, H*Lk)

        # --- one fused fc matmul over all batches / heads ---
        o_cat = jnp.concatenate(o_rows, axis=0)                # (B*Lq, H*dv)
        y = jnp.dot(o_cat, fcw_ref[...], preferred_element_type=jnp.float32)
        y = y + fcb_ref[...]
        if use_res:
            y = y + xq                                         # residual (pre-projection q)

        # LayerNorm over the feature axis (biased variance, eps=1e-5)
        mu = jnp.mean(y, axis=-1, keepdims=True)
        var = jnp.mean((y - mu) ** 2, axis=-1, keepdims=True)
        out_ref[...] = (y - mu) * jax.lax.rsqrt(var + eps) * g_ref[...] + b_ref[...]

    return kernel


def multi_head_attention(params, q, k, v, mask, use_res=False):
    """Fused MHA forward.

    q, k, v : (B, L, d_model) float32
    mask    : (B, Lq, Lk) bool/int (True == masked)
    returns : (output (B, Lq, d_model), attn (n_head*B, Lq, Lk))  — same
              head-major attn layout as the PyTorch module.
    """
    n_head = params["n_head"]
    d_k = params["d_k"]
    d_v = params["d_v"]
    B, Lq, Dm = q.shape
    _, Lk, _ = k.shape

    # Flatten batch into the sublane axis (free, contiguous reshapes).
    xq = q.reshape(B * Lq, Dm)
    xk = k.reshape(B * Lk, Dm)
    xv = v.reshape(B * Lk, Dm)
    mask_i = mask.astype(jnp.int32)                            # (B, Lq, Lk)

    fcb = params["fc_b"].reshape(1, Dm)
    g = params["ln_g"].reshape(1, Dm)
    bt = params["ln_b"].reshape(1, Dm)

    temperature = float(np.power(d_k, 0.5))
    kernel = _make_mha_kernel(B, Lq, Lk, n_head, d_k, d_v, temperature, use_res)

    flops = 2 * (B * Lq * Dm * n_head * d_k          # Q projection
                 + B * Lk * Dm * n_head * d_k        # K projection
                 + B * Lk * Dm * n_head * d_v        # V projection
                 + B * n_head * Lq * Lk * d_k        # scores
                 + B * n_head * Lq * Lk * d_v        # probs @ V
                 + B * Lq * n_head * d_v * Dm)       # fc
    bytes_accessed = 4 * (xq.size + xk.size + xv.size + mask_i.size
                          + params["w_qs"].size + params["w_ks"].size
                          + params["w_vs"].size + params["fc_w"].size
                          + 3 * Dm + B * Lq * Dm + B * Lq * n_head * Lk)

    out2d, attn2d = pl.pallas_call(
        kernel,
        out_shape=(jax.ShapeDtypeStruct((B * Lq, Dm), jnp.float32),
                   jax.ShapeDtypeStruct((B * Lq, n_head * Lk), jnp.float32)),
        cost_estimate=pl.CostEstimate(flops=int(flops),
                                      transcendentals=int(B * n_head * Lq * Lk),
                                      bytes_accessed=int(bytes_accessed)),
    )(xq, xk, xv, mask_i,
      params["w_qs"], params["w_ks"], params["w_vs"], params["fc_w"],
      fcb, g, bt)

    out = out2d.reshape(B, Lq, Dm)
    # lane-dense kernel layout -> PyTorch head-major (H*B, Lq, Lk) layout
    attn = (attn2d.reshape(B, Lq, n_head, Lk)
                  .transpose(2, 0, 1, 3)
                  .reshape(n_head * B, Lq, Lk))
    return out, attn


# ---------------------------------------------------------------------------
# Pure-JAX reference (for validation)
# ---------------------------------------------------------------------------

def reference(params, q, k, v, mask, use_res=False):
    n_head, d_k, d_v = params["n_head"], params["d_k"], params["d_v"]
    B, Lq, Dm = q.shape
    Lk = k.shape[1]
    qh = (q.reshape(B * Lq, Dm) @ params["w_qs"]).reshape(B, Lq, n_head, d_k)
    kh = (k.reshape(B * Lk, Dm) @ params["w_ks"]).reshape(B, Lk, n_head, d_k)
    vh = (v.reshape(B * Lk, Dm) @ params["w_vs"]).reshape(B, Lk, n_head, d_v)
    qh = qh.transpose(2, 0, 1, 3).reshape(n_head * B, Lq, d_k)
    kh = kh.transpose(2, 0, 1, 3).reshape(n_head * B, Lk, d_k)
    vh = vh.transpose(2, 0, 1, 3).reshape(n_head * B, Lk, d_v)
    m = jnp.tile(mask, (n_head, 1, 1))
    s = jnp.einsum("bqd,bkd->bqk", qh, kh) / np.power(d_k, 0.5)
    s = jnp.where(m, -10000000000.0, s)
    p = jax.nn.softmax(s, axis=2)
    o = jnp.einsum("bqk,bkd->bqd", p, vh)
    o = o.reshape(n_head, B, Lq, d_v).transpose(1, 2, 0, 3).reshape(B * Lq, n_head * d_v)
    y = o @ params["fc_w"] + params["fc_b"]
    if use_res:
        y = y + q.reshape(B * Lq, Dm)
    mu = jnp.mean(y, axis=-1, keepdims=True)
    var = jnp.mean((y - mu) ** 2, axis=-1, keepdims=True)
    y = (y - mu) * jax.lax.rsqrt(var + 1e-5) * params["ln_g"] + params["ln_b"]
    return y.reshape(B, Lq, Dm), p


# ---------------------------------------------------------------------------
# Main
# ---------------------------------------------------------------------------

if __name__ == "__main__":
    # Sizes: batch=2, seq=8, d_model=32, n_head=4, d_k=d_v=8
    B, L, d_model, n_head, d_k, d_v = 2, 8, 32, 4, 8, 8

    key = jax.random.PRNGKey(0)
    ks = jax.random.split(key, 8)

    std_qk = np.sqrt(2.0 / (d_model + d_k))
    std_v = np.sqrt(2.0 / (d_model + d_v))
    xavier = np.sqrt(2.0 / (n_head * d_v + d_model))

    params = {
        "n_head": n_head, "d_k": d_k, "d_v": d_v,
        # stored as (in, out); math matches nn.Linear (x @ W.T)
        "w_qs": (jax.random.normal(ks[0], (d_model, n_head * d_k)) * std_qk).astype(jnp.float32),
        "w_ks": (jax.random.normal(ks[1], (d_model, n_head * d_k)) * std_qk).astype(jnp.float32),
        "w_vs": (jax.random.normal(ks[2], (d_model, n_head * d_v)) * std_v).astype(jnp.float32),
        "fc_w": (jax.random.normal(ks[3], (n_head * d_v, d_model)) * xavier).astype(jnp.float32),
        "fc_b": (jax.random.uniform(ks[4], (d_model,), minval=-0.1, maxval=0.1)).astype(jnp.float32),
        "ln_g": jnp.ones((d_model,), jnp.float32),
        "ln_b": jnp.zeros((d_model,), jnp.float32),
    }

    q = jax.random.normal(ks[5], (B, L, d_model), dtype=jnp.float32)
    k = jax.random.normal(ks[6], (B, L, d_model), dtype=jnp.float32)
    v = jax.random.normal(ks[7], (B, L, d_model), dtype=jnp.float32)

    # key-padding style mask: batch 1 has its last 2 key positions masked
    mask = np.zeros((B, L, L), dtype=bool)
    mask[1, :, -2:] = True
    mask = jnp.asarray(mask)

    # --- no-residual path (matches the reference) ---
    out, attn = multi_head_attention(params, q, k, v, mask, use_res=False)
    out = jax.block_until_ready(out)
    attn = jax.block_until_ready(attn)

    ref_out, ref_attn = reference(params, q, k, v, mask, use_res=False)
    np.testing.assert_allclose(np.asarray(out), np.asarray(ref_out), atol=1e-3, rtol=1e-3)
    np.testing.assert_allclose(np.asarray(attn), np.asarray(ref_attn), atol=1e-3, rtol=1e-3)

    # --- residual path ---
    out_r, attn_r = multi_head_attention(params, q, k, v, mask, use_res=True)
    out_r = jax.block_until_ready(out_r)
    ref_out_r, ref_attn_r = reference(params, q, k, v, mask, use_res=True)
    np.testing.assert_allclose(np.asarray(out_r), np.asarray(ref_out_r), atol=1e-3, rtol=1e-3)
    np.testing.assert_allclose(np.asarray(attn_r), np.asarray(ref_attn_r), atol=1e-3, rtol=1e-3)

    print("KERNEL_OK")
</pallas_src>

<mosaic_0001>
module attributes {stable_mosaic.version = 11 : i64} {
  func.func @kernel(%arg0: memref<16x32xf32, #tpu.memory_space<vmem>>, %arg1: memref<16x32xf32, #tpu.memory_space<vmem>>, %arg2: memref<16x32xf32, #tpu.memory_space<vmem>>, %arg3: memref<2x8x8xi32, #tpu.memory_space<vmem>>, %arg4: memref<32x32xf32, #tpu.memory_space<vmem>>, %arg5: memref<32x32xf32, #tpu.memory_space<vmem>>, %arg6: memref<32x32xf32, #tpu.memory_space<vmem>>, %arg7: memref<32x32xf32, #tpu.memory_space<vmem>>, %arg8: memref<1x32xf32, #tpu.memory_space<vmem>>, %arg9: memref<1x32xf32, #tpu.memory_space<vmem>>, %arg10: memref<1x32xf32, #tpu.memory_space<vmem>>, %arg11: memref<16x32xf32, #tpu.memory_space<vmem>>, %arg12: memref<16x32xf32, #tpu.memory_space<vmem>>) attributes {dimension_semantics = [], scalar_prefetch = 0 : i64, scratch_operands = 0 : i64, tpu.core_type = #tpu.core_type<tc>} {
    %c0 = arith.constant 0 : index
    %c0_0 = arith.constant 0 : index
    %0 = vector.load %arg0[%c0, %c0_0] : memref<16x32xf32, #tpu.memory_space<vmem>>, vector<16x32xf32>
    %c0_1 = arith.constant 0 : index
    %c0_2 = arith.constant 0 : index
    %1 = vector.load %arg1[%c0_1, %c0_2] : memref<16x32xf32, #tpu.memory_space<vmem>>, vector<16x32xf32>
    %c0_3 = arith.constant 0 : index
    %c0_4 = arith.constant 0 : index
    %2 = vector.load %arg2[%c0_3, %c0_4] : memref<16x32xf32, #tpu.memory_space<vmem>>, vector<16x32xf32>
    %c0_5 = arith.constant 0 : index
    %c0_6 = arith.constant 0 : index
    %3 = vector.load %arg4[%c0_5, %c0_6] : memref<32x32xf32, #tpu.memory_space<vmem>>, vector<32x32xf32>
    %cst = arith.constant dense<0.000000e+00> : vector<16x32xf32>
    %4 = tpu.matmul %0, %3, %cst {dimension_numbers = #tpu.dot_dimension_numbers<[1], [0], [0], [1], [0, 0, 1, 1], [], []>} : vector<16x32xf32>, vector<32x32xf32>, vector<16x32xf32> -> vector<16x32xf32>
    %c0_7 = arith.constant 0 : index
    %c0_8 = arith.constant 0 : index
    %5 = vector.load %arg5[%c0_7, %c0_8] : memref<32x32xf32, #tpu.memory_space<vmem>>, vector<32x32xf32>
    %cst_9 = arith.constant dense<0.000000e+00> : vector<16x32xf32>
    %6 = tpu.matmul %1, %5, %cst_9 {dimension_numbers = #tpu.dot_dimension_numbers<[1], [0], [0], [1], [0, 0, 1, 1], [], []>} : vector<16x32xf32>, vector<32x32xf32>, vector<16x32xf32> -> vector<16x32xf32>
    %c0_10 = arith.constant 0 : index
    %c0_11 = arith.constant 0 : index
    %7 = vector.load %arg6[%c0_10, %c0_11] : memref<32x32xf32, #tpu.memory_space<vmem>>, vector<32x32xf32>
    %cst_12 = arith.constant dense<0.000000e+00> : vector<16x32xf32>
    %8 = tpu.matmul %2, %7, %cst_12 {dimension_numbers = #tpu.dot_dimension_numbers<[1], [0], [0], [1], [0, 0, 1, 1], [], []>} : vector<16x32xf32>, vector<32x32xf32>, vector<16x32xf32> -> vector<16x32xf32>
    %cst_13 = arith.constant 0.353553385 : f32
    %9 = vector.broadcast %cst_13 : f32 to vector<16x32xf32>
    %10 = arith.mulf %4, %9 : vector<16x32xf32>
    %11 = vector.extract_strided_slice %10 {offsets = [0, 0], sizes = [8, 32], strides = [1, 1]} : vector<16x32xf32> to vector<8x32xf32>
    %12 = vector.extract_strided_slice %6 {offsets = [0, 0], sizes = [8, 32], strides = [1, 1]} : vector<16x32xf32> to vector<8x32xf32>
    %13 = vector.extract_strided_slice %8 {offsets = [0, 0], sizes = [8, 32], strides = [1, 1]} : vector<16x32xf32> to vector<8x32xf32>
    %c0_14 = arith.constant 0 : index
    %c0_15 = arith.constant 0 : index
    %c0_16 = arith.constant 0 : index
    %14 = vector.load %arg3[%c0_14, %c0_15, %c0_16] : memref<2x8x8xi32, #tpu.memory_space<vmem>>, vector<1x8x8xi32>
    %15 = vector.shape_cast %14 : vector<1x8x8xi32> to vector<8x8xi32>
    %c0_i32 = arith.constant 0 : i32
    %16 = vector.broadcast %c0_i32 : i32 to vector<8x8xi32>
    %17 = arith.cmpi ne, %15, %16 : vector<8x8xi32>
    %18 = vector.extract_strided_slice %11 {offsets = [0, 0], sizes = [8, 8], strides = [1, 1]} : vector<8x32xf32> to vector<8x8xf32>
    %19 = vector.extract_strided_slice %12 {offsets = [0, 0], sizes = [8, 8], strides = [1, 1]} : vector<8x32xf32> to vector<8x8xf32>
    %20 = vector.extract_strided_slice %13 {offsets = [0, 0], sizes = [8, 8], strides = [1, 1]} : vector<8x32xf32> to vector<8x8xf32>
    %cst_17 = arith.constant dense<0.000000e+00> : vector<8x8xf32>
    %21 = tpu.matmul %18, %19, %cst_17 {dimension_numbers = #tpu.dot_dimension_numbers<[1], [1], [0], [0], [0, 0, 1, 0], [], []>} : vector<8x8xf32>, vector<8x8xf32>, vector<8x8xf32> -> vector<8x8xf32>
    %cst_18 = arith.constant -1.000000e+10 : f32
    %22 = vector.broadcast %cst_18 : f32 to vector<8x8xf32>
    %23 = arith.select %17, %22, %21 : vector<8x8xi1>, vector<8x8xf32>
    %cst_19 = arith.constant dense<0xFF800000> : vector<8xf32>
    %24 = vector.multi_reduction <maximumf>, %23, %cst_19 [1] : vector<8x8xf32> to vector<8xf32>
    %25 = vector.shape_cast %24 : vector<8xf32> to vector<8x1xf32>
    %26 = vector.broadcast %25 : vector<8x1xf32> to vector<8x8xf32>
    %27 = arith.subf %23, %26 : vector<8x8xf32>
    %28 = math.exp %27 : vector<8x8xf32>
    %cst_20 = arith.constant dense<0.000000e+00> : vector<8xf32>
    %29 = vector.multi_reduction <add>, %28, %cst_20 [1] : vector<8x8xf32> to vector<8xf32>
    %30 = vector.shape_cast %29 : vector<8xf32> to vector<8x1xf32>
    %31 = vector.broadcast %30 : vector<8x1xf32> to vector<8x8xf32>
    %32 = arith.divf %28, %31 : vector<8x8xf32>
    %cst_21 = arith.constant dense<0.000000e+00> : vector<8x8xf32>
    %33 = tpu.matmul %32, %20, %cst_21 {dimension_numbers = #tpu.dot_dimension_numbers<[1], [0], [0], [1], [0, 0, 1, 1], [], []>} : vector<8x8xf32>, vector<8x8xf32>, vector<8x8xf32> -> vector<8x8xf32>
    %34 = vector.extract_strided_slice %11 {offsets = [0, 8], sizes = [8, 8], strides = [1, 1]} : vector<8x32xf32> to vector<8x8xf32>
    %35 = vector.extract_strided_slice %12 {offsets = [0, 8], sizes = [8, 8], strides = [1, 1]} : vector<8x32xf32> to vector<8x8xf32>
    %36 = vector.extract_strided_slice %13 {offsets = [0, 8], sizes = [8, 8], strides = [1, 1]} : vector<8x32xf32> to vector<8x8xf32>
    %cst_22 = arith.constant dense<0.000000e+00> : vector<8x8xf32>
    %37 = tpu.matmul %34, %35, %cst_22 {dimension_numbers = #tpu.dot_dimension_numbers<[1], [1], [0], [0], [0, 0, 1, 0], [], []>} : vector<8x8xf32>, vector<8x8xf32>, vector<8x8xf32> -> vector<8x8xf32>
    %cst_23 = arith.constant -1.000000e+10 : f32
    %38 = vector.broadcast %cst_23 : f32 to vector<8x8xf32>
    %39 = arith.select %17, %38, %37 : vector<8x8xi1>, vector<8x8xf32>
    %cst_24 = arith.constant dense<0xFF800000> : vector<8xf32>
    %40 = vector.multi_reduction <maximumf>, %39, %cst_24 [1] : vector<8x8xf32> to vector<8xf32>
    %41 = vector.shape_cast %40 : vector<8xf32> to vector<8x1xf32>
    %42 = vector.broadcast %41 : vector<8x1xf32> to vector<8x8xf32>
    %43 = arith.subf %39, %42 : vector<8x8xf32>
    %44 = math.exp %43 : vector<8x8xf32>
    %cst_25 = arith.constant dense<0.000000e+00> : vector<8xf32>
    %45 = vector.multi_reduction <add>, %44, %cst_25 [1] : vector<8x8xf32> to vector<8xf32>
    %46 = vector.shape_cast %45 : vector<8xf32> to vector<8x1xf32>
    %47 = vector.broadcast %46 : vector<8x1xf32> to vector<8x8xf32>
    %48 = arith.divf %44, %47 : vector<8x8xf32>
    %cst_26 = arith.constant dense<0.000000e+00> : vector<8x8xf32>
    %49 = tpu.matmul %48, %36, %cst_26 {dimension_numbers = #tpu.dot_dimension_numbers<[1], [0], [0], [1], [0, 0, 1, 1], [], []>} : vector<8x8xf32>, vector<8x8xf32>, vector<8x8xf32> -> vector<8x8xf32>
    %50 = vector.extract_strided_slice %11 {offsets = [0, 16], sizes = [8, 8], strides = [1, 1]} : vector<8x32xf32> to vector<8x8xf32>
    %51 = vector.extract_strided_slice %12 {offsets = [0, 16], sizes = [8, 8], strides = [1, 1]} : vector<8x32xf32> to vector<8x8xf32>
    %52 = vector.extract_strided_slice %13 {offsets = [0, 16], sizes = [8, 8], strides = [1, 1]} : vector<8x32xf32> to vector<8x8xf32>
    %cst_27 = arith.constant dense<0.000000e+00> : vector<8x8xf32>
    %53 = tpu.matmul %50, %51, %cst_27 {dimension_numbers = #tpu.dot_dimension_numbers<[1], [1], [0], [0], [0, 0, 1, 0], [], []>} : vector<8x8xf32>, vector<8x8xf32>, vector<8x8xf32> -> vector<8x8xf32>
    %cst_28 = arith.constant -1.000000e+10 : f32
    %54 = vector.broadcast %cst_28 : f32 to vector<8x8xf32>
    %55 = arith.select %17, %54, %53 : vector<8x8xi1>, vector<8x8xf32>
    %cst_29 = arith.constant dense<0xFF800000> : vector<8xf32>
    %56 = vector.multi_reduction <maximumf>, %55, %cst_29 [1] : vector<8x8xf32> to vector<8xf32>
    %57 = vector.shape_cast %56 : vector<8xf32> to vector<8x1xf32>
    %58 = vector.broadcast %57 : vector<8x1xf32> to vector<8x8xf32>
    %59 = arith.subf %55, %58 : vector<8x8xf32>
    %60 = math.exp %59 : vector<8x8xf32>
    %cst_30 = arith.constant dense<0.000000e+00> : vector<8xf32>
    %61 = vector.multi_reduction <add>, %60, %cst_30 [1] : vector<8x8xf32> to vector<8xf32>
    %62 = vector.shape_cast %61 : vector<8xf32> to vector<8x1xf32>
    %63 = vector.broadcast %62 : vector<8x1xf32> to vector<8x8xf32>
    %64 = arith.divf %60, %63 : vector<8x8xf32>
    %cst_31 = arith.constant dense<0.000000e+00> : vector<8x8xf32>
    %65 = tpu.matmul %64, %52, %cst_31 {dimension_numbers = #tpu.dot_dimension_numbers<[1], [0], [0], [1], [0, 0, 1, 1], [], []>} : vector<8x8xf32>, vector<8x8xf32>, vector<8x8xf32> -> vector<8x8xf32>
    %66 = vector.extract_strided_slice %11 {offsets = [0, 24], sizes = [8, 8], strides = [1, 1]} : vector<8x32xf32> to vector<8x8xf32>
    %67 = vector.extract_strided_slice %12 {offsets = [0, 24], sizes = [8, 8], strides = [1, 1]} : vector<8x32xf32> to vector<8x8xf32>
    %68 = vector.extract_strided_slice %13 {offsets = [0, 24], sizes = [8, 8], strides = [1, 1]} : vector<8x32xf32> to vector<8x8xf32>
    %cst_32 = arith.constant dense<0.000000e+00> : vector<8x8xf32>
    %69 = tpu.matmul %66, %67, %cst_32 {dimension_numbers = #tpu.dot_dimension_numbers<[1], [1], [0], [0], [0, 0, 1, 0], [], []>} : vector<8x8xf32>, vector<8x8xf32>, vector<8x8xf32> -> vector<8x8xf32>
    %cst_33 = arith.constant -1.000000e+10 : f32
    %70 = vector.broadcast %cst_33 : f32 to vector<8x8xf32>
    %71 = arith.select %17, %70, %69 : vector<8x8xi1>, vector<8x8xf32>
    %cst_34 = arith.constant dense<0xFF800000> : vector<8xf32>
    %72 = vector.multi_reduction <maximumf>, %71, %cst_34 [1] : vector<8x8xf32> to vector<8xf32>
    %73 = vector.shape_cast %72 : vector<8xf32> to vector<8x1xf32>
    %74 = vector.broadcast %73 : vector<8x1xf32> to vector<8x8xf32>
    %75 = arith.subf %71, %74 : vector<8x8xf32>
    %76 = math.exp %75 : vector<8x8xf32>
    %cst_35 = arith.constant dense<0.000000e+00> : vector<8xf32>
    %77 = vector.multi_reduction <add>, %76, %cst_35 [1] : vector<8x8xf32> to vector<8xf32>
    %78 = vector.shape_cast %77 : vector<8xf32> to vector<8x1xf32>
    %79 = vector.broadcast %78 : vector<8x1xf32> to vector<8x8xf32>
    %80 = arith.divf %76, %79 : vector<8x8xf32>
    %cst_36 = arith.constant dense<0.000000e+00> : vector<8x8xf32>
    %81 = tpu.matmul %80, %68, %cst_36 {dimension_numbers = #tpu.dot_dimension_numbers<[1], [0], [0], [1], [0, 0, 1, 1], [], []>} : vector<8x8xf32>, vector<8x8xf32>, vector<8x8xf32> -> vector<8x8xf32>
    %82 = tpu.concatenate %33, %49, %65, %81 in 1 : vector<8x8xf32>, vector<8x8xf32>, vector<8x8xf32>, vector<8x8xf32> -> vector<8x32xf32>
    %83 = tpu.concatenate %32, %48, %64, %80 in 1 : vector<8x8xf32>, vector<8x8xf32>, vector<8x8xf32>, vector<8x8xf32> -> vector<8x32xf32>
    %84 = vector.extract_strided_slice %10 {offsets = [8, 0], sizes = [8, 32], strides = [1, 1]} : vector<16x32xf32> to vector<8x32xf32>
    %85 = vector.extract_strided_slice %6 {offsets = [8, 0], sizes = [8, 32], strides = [1, 1]} : vector<16x32xf32> to vector<8x32xf32>
    %86 = vector.extract_strided_slice %8 {offsets = [8, 0], sizes = [8, 32], strides = [1, 1]} : vector<16x32xf32> to vector<8x32xf32>
    %c1 = arith.constant 1 : index
    %c0_37 = arith.constant 0 : index
    %c0_38 = arith.constant 0 : index
    %87 = vector.load %arg3[%c1, %c0_37, %c0_38] : memref<2x8x8xi32, #tpu.memory_space<vmem>>, vector<1x8x8xi32>
    %88 = vector.shape_cast %87 : vector<1x8x8xi32> to vector<8x8xi32>
    %c0_i32_39 = arith.constant 0 : i32
    %89 = vector.broadcast %c0_i32_39 : i32 to vector<8x8xi32>
    %90 = arith.cmpi ne, %88, %89 : vector<8x8xi32>
    %91 = vector.extract_strided_slice %84 {offsets = [0, 0], sizes = [8, 8], strides = [1, 1]} : vector<8x32xf32> to vector<8x8xf32>
    %92 = vector.extract_strided_slice %85 {offsets = [0, 0], sizes = [8, 8], strides = [1, 1]} : vector<8x32xf32> to vector<8x8xf32>
    %93 = vector.extract_strided_slice %86 {offsets = [0, 0], sizes = [8, 8], strides = [1, 1]} : vector<8x32xf32> to vector<8x8xf32>
    %cst_40 = arith.constant dense<0.000000e+00> : vector<8x8xf32>
    %94 = tpu.matmul %91, %92, %cst_40 {dimension_numbers = #tpu.dot_dimension_numbers<[1], [1], [0], [0], [0, 0, 1, 0], [], []>} : vector<8x8xf32>, vector<8x8xf32>, vector<8x8xf32> -> vector<8x8xf32>
    %cst_41 = arith.constant -1.000000e+10 : f32
    %95 = vector.broadcast %cst_41 : f32 to vector<8x8xf32>
    %96 = arith.select %90, %95, %94 : vector<8x8xi1>, vector<8x8xf32>
    %cst_42 = arith.constant dense<0xFF800000> : vector<8xf32>
    %97 = vector.multi_reduction <maximumf>, %96, %cst_42 [1] : vector<8x8xf32> to vector<8xf32>
    %98 = vector.shape_cast %97 : vector<8xf32> to vector<8x1xf32>
    %99 = vector.broadcast %98 : vector<8x1xf32> to vector<8x8xf32>
    %100 = arith.subf %96, %99 : vector<8x8xf32>
    %101 = math.exp %100 : vector<8x8xf32>
    %cst_43 = arith.constant dense<0.000000e+00> : vector<8xf32>
    %102 = vector.multi_reduction <add>, %101, %cst_43 [1] : vector<8x8xf32> to vector<8xf32>
    %103 = vector.shape_cast %102 : vector<8xf32> to vector<8x1xf32>
    %104 = vector.broadcast %103 : vector<8x1xf32> to vector<8x8xf32>
    %105 = arith.divf %101, %104 : vector<8x8xf32>
    %cst_44 = arith.constant dense<0.000000e+00> : vector<8x8xf32>
    %106 = tpu.matmul %105, %93, %cst_44 {dimension_numbers = #tpu.dot_dimension_numbers<[1], [0], [0], [1], [0, 0, 1, 1], [], []>} : vector<8x8xf32>, vector<8x8xf32>, vector<8x8xf32> -> vector<8x8xf32>
    %107 = vector.extract_strided_slice %84 {offsets = [0, 8], sizes = [8, 8], strides = [1, 1]} : vector<8x32xf32> to vector<8x8xf32>
    %108 = vector.extract_strided_slice %85 {offsets = [0, 8], sizes = [8, 8], strides = [1, 1]} : vector<8x32xf32> to vector<8x8xf32>
    %109 = vector.extract_strided_slice %86 {offsets = [0, 8], sizes = [8, 8], strides = [1, 1]} : vector<8x32xf32> to vector<8x8xf32>
    %cst_45 = arith.constant dense<0.000000e+00> : vector<8x8xf32>
    %110 = tpu.matmul %107, %108, %cst_45 {dimension_numbers = #tpu.dot_dimension_numbers<[1], [1], [0], [0], [0, 0, 1, 0], [], []>} : vector<8x8xf32>, vector<8x8xf32>, vector<8x8xf32> -> vector<8x8xf32>
    %cst_46 = arith.constant -1.000000e+10 : f32
    %111 = vector.broadcast %cst_46 : f32 to vector<8x8xf32>
    %112 = arith.select %90, %111, %110 : vector<8x8xi1>, vector<8x8xf32>
    %cst_47 = arith.constant dense<0xFF800000> : vector<8xf32>
    %113 = vector.multi_reduction <maximumf>, %112, %cst_47 [1] : vector<8x8xf32> to vector<8xf32>
    %114 = vector.shape_cast %113 : vector<8xf32> to vector<8x1xf32>
    %115 = vector.broadcast %114 : vector<8x1xf32> to vector<8x8xf32>
    %116 = arith.subf %112, %115 : vector<8x8xf32>
    %117 = math.exp %116 : vector<8x8xf32>
    %cst_48 = arith.constant dense<0.000000e+00> : vector<8xf32>
    %118 = vector.multi_reduction <add>, %117, %cst_48 [1] : vector<8x8xf32> to vector<8xf32>
    %119 = vector.shape_cast %118 : vector<8xf32> to vector<8x1xf32>
    %120 = vector.broadcast %119 : vector<8x1xf32> to vector<8x8xf32>
    %121 = arith.divf %117, %120 : vector<8x8xf32>
    %cst_49 = arith.constant dense<0.000000e+00> : vector<8x8xf32>
    %122 = tpu.matmul %121, %109, %cst_49 {dimension_numbers = #tpu.dot_dimension_numbers<[1], [0], [0], [1], [0, 0, 1, 1], [], []>} : vector<8x8xf32>, vector<8x8xf32>, vector<8x8xf32> -> vector<8x8xf32>
    %123 = vector.extract_strided_slice %84 {offsets = [0, 16], sizes = [8, 8], strides = [1, 1]} : vector<8x32xf32> to vector<8x8xf32>
    %124 = vector.extract_strided_slice %85 {offsets = [0, 16], sizes = [8, 8], strides = [1, 1]} : vector<8x32xf32> to vector<8x8xf32>
    %125 = vector.extract_strided_slice %86 {offsets = [0, 16], sizes = [8, 8], strides = [1, 1]} : vector<8x32xf32> to vector<8x8xf32>
    %cst_50 = arith.constant dense<0.000000e+00> : vector<8x8xf32>
    %126 = tpu.matmul %123, %124, %cst_50 {dimension_numbers = #tpu.dot_dimension_numbers<[1], [1], [0], [0], [0, 0, 1, 0], [], []>} : vector<8x8xf32>, vector<8x8xf32>, vector<8x8xf32> -> vector<8x8xf32>
    %cst_51 = arith.constant -1.000000e+10 : f32
    %127 = vector.broadcast %cst_51 : f32 to vector<8x8xf32>
    %128 = arith.select %90, %127, %126 : vector<8x8xi1>, vector<8x8xf32>
    %cst_52 = arith.constant dense<0xFF800000> : vector<8xf32>
    %129 = vector.multi_reduction <maximumf>, %128, %cst_52 [1] : vector<8x8xf32> to vector<8xf32>
    %130 = vector.shape_cast %129 : vector<8xf32> to vector<8x1xf32>
    %131 = vector.broadcast %130 : vector<8x1xf32> to vector<8x8xf32>
    %132 = arith.subf %128, %131 : vector<8x8xf32>
    %133 = math.exp %132 : vector<8x8xf32>
    %cst_53 = arith.constant dense<0.000000e+00> : vector<8xf32>
    %134 = vector.multi_reduction <add>, %133, %cst_53 [1] : vector<8x8xf32> to vector<8xf32>
    %135 = vector.shape_cast %134 : vector<8xf32> to vector<8x1xf32>
    %136 = vector.broadcast %135 : vector<8x1xf32> to vector<8x8xf32>
    %137 = arith.divf %133, %136 : vector<8x8xf32>
    %cst_54 = arith.constant dense<0.000000e+00> : vector<8x8xf32>
    %138 = tpu.matmul %137, %125, %cst_54 {dimension_numbers = #tpu.dot_dimension_numbers<[1], [0], [0], [1], [0, 0, 1, 1], [], []>} : vector<8x8xf32>, vector<8x8xf32>, vector<8x8xf32> -> vector<8x8xf32>
    %139 = vector.extract_strided_slice %84 {offsets = [0, 24], sizes = [8, 8], strides = [1, 1]} : vector<8x32xf32> to vector<8x8xf32>
    %140 = vector.extract_strided_slice %85 {offsets = [0, 24], sizes = [8, 8], strides = [1, 1]} : vector<8x32xf32> to vector<8x8xf32>
    %141 = vector.extract_strided_slice %86 {offsets = [0, 24], sizes = [8, 8], strides = [1, 1]} : vector<8x32xf32> to vector<8x8xf32>
    %cst_55 = arith.constant dense<0.000000e+00> : vector<8x8xf32>
    %142 = tpu.matmul %139, %140, %cst_55 {dimension_numbers = #tpu.dot_dimension_numbers<[1], [1], [0], [0], [0, 0, 1, 0], [], []>} : vector<8x8xf32>, vector<8x8xf32>, vector<8x8xf32> -> vector<8x8xf32>
    %cst_56 = arith.constant -1.000000e+10 : f32
    %143 = vector.broadcast %cst_56 : f32 to vector<8x8xf32>
    %144 = arith.select %90, %143, %142 : vector<8x8xi1>, vector<8x8xf32>
    %cst_57 = arith.constant dense<0xFF800000> : vector<8xf32>
    %145 = vector.multi_reduction <maximumf>, %144, %cst_57 [1] : vector<8x8xf32> to vector<8xf32>
    %146 = vector.shape_cast %145 : vector<8xf32> to vector<8x1xf32>
    %147 = vector.broadcast %146 : vector<8x1xf32> to vector<8x8xf32>
    %148 = arith.subf %144, %147 : vector<8x8xf32>
    %149 = math.exp %148 : vector<8x8xf32>
    %cst_58 = arith.constant dense<0.000000e+00> : vector<8xf32>
    %150 = vector.multi_reduction <add>, %149, %cst_58 [1] : vector<8x8xf32> to vector<8xf32>
    %151 = vector.shape_cast %150 : vector<8xf32> to vector<8x1xf32>
    %152 = vector.broadcast %151 : vector<8x1xf32> to vector<8x8xf32>
    %153 = arith.divf %149, %152 : vector<8x8xf32>
    %cst_59 = arith.constant dense<0.000000e+00> : vector<8x8xf32>
    %154 = tpu.matmul %153, %141, %cst_59 {dimension_numbers = #tpu.dot_dimension_numbers<[1], [0], [0], [1], [0, 0, 1, 1], [], []>} : vector<8x8xf32>, vector<8x8xf32>, vector<8x8xf32> -> vector<8x8xf32>
    %155 = tpu.concatenate %106, %122, %138, %154 in 1 : vector<8x8xf32>, vector<8x8xf32>, vector<8x8xf32>, vector<8x8xf32> -> vector<8x32xf32>
    %156 = tpu.concatenate %105, %121, %137, %153 in 1 : vector<8x8xf32>, vector<8x8xf32>, vector<8x8xf32>, vector<8x8xf32> -> vector<8x32xf32>
    %157 = tpu.concatenate %83, %156 in 0 : vector<8x32xf32>, vector<8x32xf32> -> vector<16x32xf32>
    %c0_60 = arith.constant 0 : index
    %c0_61 = arith.constant 0 : index
    %158 = vector.load %arg12[%c0_60, %c0_61] : memref<16x32xf32, #tpu.memory_space<vmem>>, vector<16x32xf32>
    tpu.vector_store %arg12[%c0_60, %c0_61], %157 {strides = array<i32>} : memref<16x32xf32, #tpu.memory_space<vmem>>, vector<16x32xf32>,
    %159 = tpu.concatenate %82, %155 in 0 : vector<8x32xf32>, vector<8x32xf32> -> vector<16x32xf32>
    %c0_62 = arith.constant 0 : index
    %c0_63 = arith.constant 0 : index
    %160 = vector.load %arg7[%c0_62, %c0_63] : memref<32x32xf32, #tpu.memory_space<vmem>>, vector<32x32xf32>
    %cst_64 = arith.constant dense<0.000000e+00> : vector<16x32xf32>
    %161 = tpu.matmul %159, %160, %cst_64 {dimension_numbers = #tpu.dot_dimension_numbers<[1], [0], [0], [1], [0, 0, 1, 1], [], []>} : vector<16x32xf32>, vector<32x32xf32>, vector<16x32xf32> -> vector<16x32xf32>
    %c0_65 = arith.constant 0 : index
    %c0_66 = arith.constant 0 : index
    %162 = vector.load %arg8[%c0_65, %c0_66] : memref<1x32xf32, #tpu.memory_space<vmem>>, vector<1x32xf32>
    %163 = vector.broadcast %162 : vector<1x32xf32> to vector<16x32xf32>
    %164 = arith.addf %161, %163 : vector<16x32xf32>
    %cst_67 = arith.constant dense<0.000000e+00> : vector<16xf32>
    %165 = vector.multi_reduction <add>, %164, %cst_67 [1] : vector<16x32xf32> to vector<16xf32>
    %166 = vector.shape_cast %165 : vector<16xf32> to vector<16x1xf32>
    %cst_68 = arith.constant 3.200000e+01 : f32
    %167 = vector.broadcast %cst_68 : f32 to vector<16x1xf32>
    %168 = arith.divf %166, %167 : vector<16x1xf32>
    %169 = vector.broadcast %168 : vector<16x1xf32> to vector<16x32xf32>
    %170 = arith.subf %164, %169 : vector<16x32xf32>
    %171 = arith.mulf %170, %170 : vector<16x32xf32>
    %cst_69 = arith.constant dense<0.000000e+00> : vector<16xf32>
    %172 = vector.multi_reduction <add>, %171, %cst_69 [1] : vector<16x32xf32> to vector<16xf32>
    %173 = vector.shape_cast %172 : vector<16xf32> to vector<16x1xf32>
    %cst_70 = arith.constant 3.200000e+01 : f32
    %174 = vector.broadcast %cst_70 : f32 to vector<16x1xf32>
    %175 = arith.divf %173, %174 : vector<16x1xf32>
    %176 = vector.broadcast %168 : vector<16x1xf32> to vector<16x32xf32>
    %177 = arith.subf %164, %176 : vector<16x32xf32>
    %cst_71 = arith.constant 9.99999974E-6 : f32
    %178 = vector.broadcast %cst_71 : f32 to vector<16x1xf32>
    %179 = arith.addf %175, %178 : vector<16x1xf32>
    %180 = math.rsqrt %179 : vector<16x1xf32>
    %181 = vector.broadcast %180 : vector<16x1xf32> to vector<16x32xf32>
    %182 = arith.mulf %177, %181 : vector<16x32xf32>
    %c0_72 = arith.constant 0 : index
    %c0_73 = arith.constant 0 : index
    %183 = vector.load %arg9[%c0_72, %c0_73] : memref<1x32xf32, #tpu.memory_space<vmem>>, vector<1x32xf32>
    %184 = vector.broadcast %183 : vector<1x32xf32> to vector<16x32xf32>
    %185 = arith.mulf %182, %184 : vector<16x32xf32>
    %c0_74 = arith.constant 0 : index
    %c0_75 = arith.constant 0 : index
    %186 = vector.load %arg10[%c0_74, %c0_75] : memref<1x32xf32, #tpu.memory_space<vmem>>, vector<1x32xf32>
    %187 = vector.broadcast %186 : vector<1x32xf32> to vector<16x32xf32>
    %188 = arith.addf %185, %187 : vector<16x32xf32>
    %c0_76 = arith.constant 0 : index
    %c0_77 = arith.constant 0 : index
    %189 = vector.load %arg11[%c0_76, %c0_77] : memref<16x32xf32, #tpu.memory_space<vmem>>, vector<16x32xf32>
    tpu.vector_store %arg11[%c0_76, %c0_77], %188 {strides = array<i32>} : memref<16x32xf32, #tpu.memory_space<vmem>>, vector<16x32xf32>,
    return
  }
}

</mosaic_0001>

<llo_original>
// kernel: tpu_custom_call.1
$region0: #{tpu_custom_call.1}
  #allocation0 [shape = 'u32[]', space=smem, size = 0x4, offset = 0x4, fixed_abs, tag = 'smem constant byte address 0x4 - core index']
  #allocation1 [shape = 'u32[144,128]{1,0:T(1,128)}', space=vmem, size = 0x12000, scoped, tag = 'internal scratch']
  %s0 = inlined_call_operand.hbm [shape: f32[16,32], index: 0, kind: input, shape index: {}]
  %s1 = inlined_call_operand.hbm [shape: f32[16,32], index: 1, kind: input, shape index: {}]
  %s2 = inlined_call_operand.hbm [shape: f32[16,32], index: 2, kind: input, shape index: {}]
  %s3 = inlined_call_operand.hbm [shape: s32[2,8,8], index: 3, kind: input, shape index: {}]
  %s4 = inlined_call_operand.hbm [shape: f32[32,32], index: 4, kind: input, shape index: {}]
  %s5 = inlined_call_operand.hbm [shape: f32[32,32], index: 5, kind: input, shape index: {}]
  %s6 = inlined_call_operand.hbm [shape: f32[32,32], index: 6, kind: input, shape index: {}]
  %s7 = inlined_call_operand.hbm [shape: f32[32,32], index: 7, kind: input, shape index: {}]
  %s8 = inlined_call_operand.vmem [shape: f32[1,32], index: 8, kind: input, shape index: {}]
  %s9 = inlined_call_operand.vmem [shape: f32[1,32], index: 9, kind: input, shape index: {}]
  %s10 = inlined_call_operand.vmem [shape: f32[1,32], index: 10, kind: input, shape index: {}]
  %s11 = inlined_call_operand.hbm [shape: f32[16,32], index: 11, kind: output, shape index: {0}]
  %s12 = inlined_call_operand.hbm [shape: f32[16,32], index: 12, kind: output, shape index: {1}]
  %13 = xla_tuple %s11, %s12
  %s14 = sld [smem:[#allocation0]]
  $region94: #{tpu_custom_call.1} parent=0
    _
  %s16 = ssub.s32 1, %s14
  %s17 = scalar_select 0, %s16, %s14
  $region1: #{tpu_custom_call.1} parent=0
    #allocation2 [shape = 'u8[8192]{0}', space=vmem, size = 0x2000, scoped, tag = 'input window, operand 0, single buffered']
    #allocation3 [shape = 's32[1]{0}', space=sflag, size = 0x4, scoped, tag = 'scoped memory for tpu_custom_call.1']
    #allocation4 [shape = 's32[1]{0}', space=sflag, size = 0x4, scoped, tag = 'scoped memory for tpu_custom_call.1']
    #allocation5 [shape = 'u8[8192]{0}', space=vmem, size = 0x2000, scoped, tag = 'input window, operand 1, single buffered']
    #allocation6 [shape = 's32[1]{0}', space=sflag, size = 0x4, scoped, tag = 'scoped memory for tpu_custom_call.1']
    #allocation7 [shape = 'u8[8192]{0}', space=vmem, size = 0x2000, scoped, tag = 'input window, operand 2, single buffered']
    #allocation8 [shape = 'u8[8192]{0}', space=vmem, size = 0x2000, scoped, tag = 'input window, operand 3, single buffered']
    #allocation9 [shape = 's32[1]{0}', space=sflag, size = 0x4, scoped, tag = 'scoped memory for tpu_custom_call.1']
    #allocation10 [shape = 'u8[16384]{0}', space=vmem, size = 0x4000, scoped, tag = 'input window, operand 4, single buffered']
    #allocation11 [shape = 'u8[16384]{0}', space=vmem, size = 0x4000, scoped, tag = 'input window, operand 5, single buffered']
    #allocation12 [shape = 's32[1]{0}', space=sflag, size = 0x4, scoped, tag = 'scoped memory for tpu_custom_call.1']
    #allocation13 [shape = 'u8[16384]{0}', space=vmem, size = 0x4000, scoped, tag = 'input window, operand 6, single buffered']
    #allocation14 [shape = 'u8[16384]{0}', space=vmem, size = 0x4000, scoped, tag = 'input window, operand 7, single buffered']
    #allocation15 [shape = 's32[1]{0}', space=sflag, size = 0x4, scoped, tag = 'scoped memory for tpu_custom_call.1']
    #allocation16 [shape = 'u8[8192]{0}', space=vmem, size = 0x2000, scoped, tag = 'output window, operand 0, single buffered']
    #allocation17 [shape = 'u8[8192]{0}', space=vmem, size = 0x2000, scoped, tag = 'output window, operand 1, single buffered']
    #allocation18 [shape = 's32[1]{0}', space=sflag, size = 0x4, scoped, tag = 'scoped memory for tpu_custom_call.1']
    %18 = vsyncpa [#allocation3], 0
    %19 = vsyncpa [#allocation6], 0
    %20 = vsyncpa [#allocation9], 0
    %21 = vsyncpa [#allocation12], 0
    %22 = vsyncpa [#allocation15], 0
    %23 = vsyncpa [#allocation4], 0
    %24 = vsyncpa [#allocation18], 0
    // Predicated region
    $region2: #{tpu_custom_call.1} parent=1 // pred_check
      _
    $region3: #{tpu_custom_call.1} parent=1 // pred_check_branch
      %26 = sbr.rel (0) target = $region5
    $region4: #{tpu_custom_call.1} parent=1 // pred_region
      %s28 = ssub.s32 256, 256
      %29 = vsyncadd [#allocation3], %s28
      %s30 = sshll.u32 [#allocation2], 4
      %s31 = int_to_ptr.vmem [resolvable:$true] %s30
      %36 = dma.hbm_to_vmem [thread:$0]  %s0, 256, %s31, [#allocation3], 128, 128, 8
    $region5: #{tpu_custom_call.1} parent=1 // pred_fallthru
      _
    // Predicated region
    $region6: #{tpu_custom_call.1} parent=1 // pred_check
      _
    $region7: #{tpu_custom_call.1} parent=1 // pred_check_branch
      %38 = sbr.rel (0) target = $region9
    $region8: #{tpu_custom_call.1} parent=1 // pred_region
      %s40 = ssub.s32 256, 256
      %41 = vsyncadd [#allocation6], %s40
      %s42 = sshll.u32 [#allocation5], 4
      %s43 = int_to_ptr.vmem [resolvable:$true] %s42
      %48 = dma.hbm_to_vmem [thread:$0]  %s1, 256, %s43, [#allocation6], 128, 128, 8
    $region9: #{tpu_custom_call.1} parent=1 // pred_fallthru
      _
    // Predicated region
    $region10: #{tpu_custom_call.1} parent=1 // pred_check
      _
    $region11: #{tpu_custom_call.1} parent=1 // pred_check_branch
      %50 = sbr.rel (0) target = $region13
    $region12: #{tpu_custom_call.1} parent=1 // pred_region
      %s52 = ssub.s32 256, 256
      %53 = vsyncadd [#allocation6], %s52
      %s54 = sshll.u32 [#allocation7], 4
      %s55 = int_to_ptr.vmem [resolvable:$true] %s54
      %60 = dma.hbm_to_vmem [thread:$0]  %s2, 256, %s55, [#allocation6], 128, 128, 8
    $region13: #{tpu_custom_call.1} parent=1 // pred_fallthru
      _
    // Predicated region
    $region14: #{tpu_custom_call.1} parent=1 // pred_check
      _
    $region15: #{tpu_custom_call.1} parent=1 // pred_check_branch
      %62 = sbr.rel (0) target = $region17
    $region16: #{tpu_custom_call.1} parent=1 // pred_region
      %s64 = ssub.s32 256, 256
      %65 = vsyncadd [#allocation9], %s64
      %s66 = sshll.u32 [#allocation8], 4
      %s67 = int_to_ptr.vmem [resolvable:$true] %s66
      %72 = dma.hbm_to_vmem [thread:$0]  %s3, 256, %s67, [#allocation9], 128, 128, 8
    $region17: #{tpu_custom_call.1} parent=1 // pred_fallthru
      _
    // Predicated region
    $region18: #{tpu_custom_call.1} parent=1 // pred_check
      _
    $region19: #{tpu_custom_call.1} parent=1 // pred_check_branch
      %74 = sbr.rel (0) target = $region21
    $region20: #{tpu_custom_call.1} parent=1 // pred_region
      %s76 = ssub.s32 512, 512
      %77 = vsyncadd [#allocation9], %s76
      %s78 = sshll.u32 [#allocation10], 4
      %s79 = int_to_ptr.vmem [resolvable:$true] %s78
      %84 = dma.hbm_to_vmem [thread:$0]  %s4, 512, %s79, [#allocation9], 128, 128, 8
    $region21: #{tpu_custom_call.1} parent=1 // pred_fallthru
      _
    // Predicated region
    $region22: #{tpu_custom_call.1} parent=1 // pred_check
      _
    $region23: #{tpu_custom_call.1} parent=1 // pred_check_branch
      %86 = sbr.rel (0) target = $region25
    $region24: #{tpu_custom_call.1} parent=1 // pred_region
      %s88 = ssub.s32 512, 512
      %89 = vsyncadd [#allocation12], %s88
      %s90 = sshll.u32 [#allocation11], 4
      %s91 = int_to_ptr.vmem [resolvable:$true] %s90
      %96 = dma.hbm_to_vmem [thread:$0]  %s5, 512, %s91, [#allocation12], 128, 128, 8
    $region25: #{tpu_custom_call.1} parent=1 // pred_fallthru
      _
    // Predicated region
    $region26: #{tpu_custom_call.1} parent=1 // pred_check
      _
    $region27: #{tpu_custom_call.1} parent=1 // pred_check_branch
      %98 = sbr.rel (0) target = $region29
    $region28: #{tpu_custom_call.1} parent=1 // pred_region
      %s100 = ssub.s32 512, 512
      %101 = vsyncadd [#allocation12], %s100
      %s102 = sshll.u32 [#allocation13], 4
      %s103 = int_to_ptr.vmem [resolvable:$true] %s102
      %108 = dma.hbm_to_vmem [thread:$0]  %s6, 512, %s103, [#allocation12], 128, 128, 8
    $region29: #{tpu_custom_call.1} parent=1 // pred_fallthru
      _
    // Predicated region
    $region30: #{tpu_custom_call.1} parent=1 // pred_check
      _
    $region31: #{tpu_custom_call.1} parent=1 // pred_check_branch
      %110 = sbr.rel (0) target = $region33
    $region32: #{tpu_custom_call.1} parent=1 // pred_region
      %s112 = ssub.s32 512, 512
      %113 = vsyncadd [#allocation15], %s112
      %s114 = sshll.u32 [#allocation14], 4
      %s115 = int_to_ptr.vmem [resolvable:$true] %s114
      %120 = dma.hbm_to_vmem [thread:$0]  %s7, 512, %s115, [#allocation15], 128, 128, 8
    $region33: #{tpu_custom_call.1} parent=1 // pred_fallthru
      _
    // Predicated region
    $region34: #{tpu_custom_call.1} parent=1 // pred_check
      _
    $region35: #{tpu_custom_call.1} parent=1 // pred_check_branch
      %122 = sbr.rel (0) target = $region37
    $region36: #{tpu_custom_call.1} parent=1 // pred_region
      _
    $region37: #{tpu_custom_call.1} parent=1 // pred_fallthru
      _
    // Predicated region
    $region38: #{tpu_custom_call.1} parent=1 // pred_check
      _
    $region39: #{tpu_custom_call.1} parent=1 // pred_check_branch
      %124 = sbr.rel (0) target = $region41
    $region40: #{tpu_custom_call.1} parent=1 // pred_region
      _
    $region41: #{tpu_custom_call.1} parent=1 // pred_fallthru
      _
    // Predicated region
    $region42: #{tpu_custom_call.1} parent=1 // pred_check
      _
    $region43: #{tpu_custom_call.1} parent=1 // pred_check_branch
      %126 = sbr.rel (0) target = $region45
    $region44: #{tpu_custom_call.1} parent=1 // pred_region
      _
    $region45: #{tpu_custom_call.1} parent=1 // pred_fallthru
      _
    // Predicated region
    $region46: #{tpu_custom_call.1} parent=1 // pred_check
      _
    $region47: #{tpu_custom_call.1} parent=1 // pred_check_branch
      %128 = sbr.rel (0) target = $region49
    $region48: #{tpu_custom_call.1} parent=1 // pred_region
      %129 = dma.done [#allocation3], 256
    $region49: #{tpu_custom_call.1} parent=1 // pred_fallthru
      _
    // Predicated region
    $region50: #{tpu_custom_call.1} parent=1 // pred_check
      _
    $region51: #{tpu_custom_call.1} parent=1 // pred_check_branch
      %131 = sbr.rel (0) target = $region53
    $region52: #{tpu_custom_call.1} parent=1 // pred_region
      %132 = dma.done [#allocation6], 256
    $region53: #{tpu_custom_call.1} parent=1 // pred_fallthru
      _
    // Predicated region
    $region54: #{tpu_custom_call.1} parent=1 // pred_check
      _
    $region55: #{tpu_custom_call.1} parent=1 // pred_check_branch
      %134 = sbr.rel (0) target = $region57
    $region56: #{tpu_custom_call.1} parent=1 // pred_region
      %135 = dma.done [#allocation6], 256
    $region57: #{tpu_custom_call.1} parent=1 // pred_fallthru
      _
    // Predicated region
    $region58: #{tpu_custom_call.1} parent=1 // pred_check
      _
    $region59: #{tpu_custom_call.1} parent=1 // pred_check_branch
      %137 = sbr.rel (0) target = $region61
    $region60: #{tpu_custom_call.1} parent=1 // pred_region
      %138 = dma.done [#allocation9], 256
    $region61: #{tpu_custom_call.1} parent=1 // pred_fallthru
      _
    // Predicated region
    $region62: #{tpu_custom_call.1} parent=1 // pred_check
      _
    $region63: #{tpu_custom_call.1} parent=1 // pred_check_branch
      %140 = sbr.rel (0) target = $region65
    $region64: #{tpu_custom_call.1} parent=1 // pred_region
      %141 = dma.done [#allocation9], 512
    $region65: #{tpu_custom_call.1} parent=1 // pred_fallthru
      _
    // Predicated region
    $region66: #{tpu_custom_call.1} parent=1 // pred_check
      _
    $region67: #{tpu_custom_call.1} parent=1 // pred_check_branch
      %143 = sbr.rel (0) target = $region69
    $region68: #{tpu_custom_call.1} parent=1 // pred_region
      %144 = dma.done [#allocation12], 512
    $region69: #{tpu_custom_call.1} parent=1 // pred_fallthru
      _
    // Predicated region
    $region70: #{tpu_custom_call.1} parent=1 // pred_check
      _
    $region71: #{tpu_custom_call.1} parent=1 // pred_check_branch
      %146 = sbr.rel (0) target = $region73
    $region72: #{tpu_custom_call.1} parent=1 // pred_region
      %147 = dma.done [#allocation12], 512
    $region73: #{tpu_custom_call.1} parent=1 // pred_fallthru
      _
    // Predicated region
    $region74: #{tpu_custom_call.1} parent=1 // pred_check
      _
    $region75: #{tpu_custom_call.1} parent=1 // pred_check_branch
      %149 = sbr.rel (0) target = $region77
    $region76: #{tpu_custom_call.1} parent=1 // pred_region
      %150 = dma.done [#allocation15], 512
    $region77: #{tpu_custom_call.1} parent=1 // pred_fallthru
      _
    %v151 = vld [vmem:[#allocation2] sm:$0xff]
    %v152 = vld [vmem:[#allocation2 + $0x8] sm:$0xff]
    %v153 = vld [vmem:[#allocation5] sm:$0xff]
    %v154 = vld [vmem:[#allocation5 + $0x8] sm:$0xff]
    %v155 = vld [vmem:[#allocation7] sm:$0xff]
    %v156 = vld [vmem:[#allocation7 + $0x8] sm:$0xff]
    %v157 = vld [vmem:[#allocation10] sm:$0xff]
    %v158 = vld [vmem:[#allocation10 + $0x8] sm:$0xff]
    %v159 = vld [vmem:[#allocation10 + $0x10] sm:$0xff]
    %v160 = vld [vmem:[#allocation10 + $0x18] sm:$0xff]
    %vm161 = vcmask 261120
    %v163 = vsel %vm161, %v151, 0
    %v166 = vsel %vm161, %v152, 0
    %168 = vmatprep.subr.mxu0 0.0
    %169 = vmatpush1.msra.mxu0 0.0
    %170 = vmatprep.subr.mxu0 0.0
    %171 = vmatpush1.msra.mxu0 0.0
    %172 = vmatprep.subr.mxu0 0.0
    %173 = vmatpush1.msra.mxu0 0.0
    %174 = vmatprep.subr.mxu0 0.0
    %175 = vmatpush1.msra.mxu0 0.0
    %176 = vmatprep.subr.mxu0 0.0
    %177 = vmatpush1.msra.mxu0 0.0
    %178 = vmatprep.subr.mxu0 0.0
    %179 = vmatpush1.msra.mxu0 0.0
    %180 = vmatprep.subr.mxu0 0.0
    %181 = vmatpush1.msra.mxu0 0.0
    %182 = vmatprep.subr.mxu0 0.0
    %183 = vmatpush1.msra.mxu0 0.0
    %184 = vmatprep.subr.mxu0 0.0
    %185 = vmatpush1.msra.mxu0 0.0
    %186 = vmatprep.subr.mxu0 0.0
    %187 = vmatpush1.msra.mxu0 0.0
    %188 = vmatprep.subr.mxu0 0.0
    %189 = vmatpush1.msra.mxu0 0.0
    %190 = vmatprep.subr.mxu0 0.0
    %191 = vmatpush1.msra.mxu0 0.0
    %192 = vmatprep.subr.mxu0 0.0
    %193 = vmatpush1.msra.mxu0 %v160
    %194 = vmatprep.subr.mxu0 0.0
    %195 = vmatpush1.msra.mxu0 %v159
    %196 = vmatprep.subr.mxu0 0.0
    %197 = vmatpush1.msra.mxu0 %v158
    %198 = vmatprep.subr.mxu0 0.0
    %199 = vmatpush1.msra.mxu0 %v157
    %200 = vmatprep.subr.mxu0 0.0
    %201 = vmatpush2.msra.mxu0 0.0
    %202 = vmatprep.subr.mxu0 0.0
    %203 = vmatpush2.msra.mxu0 0.0
    %204 = vmatprep.subr.mxu0 0.0
    %205 = vmatpush2.msra.mxu0 0.0
    %206 = vmatprep.subr.mxu0 0.0
    %207 = vmatpush2.msra.mxu0 0.0
    %208 = vmatprep.subr.mxu0 0.0
    %209 = vmatpush2.msra.mxu0 0.0
    %210 = vmatprep.subr.mxu0 0.0
    %211 = vmatpush2.msra.mxu0 0.0
    %212 = vmatprep.subr.mxu0 0.0
    %213 = vmatpush2.msra.mxu0 0.0
    %214 = vmatprep.subr.mxu0 0.0
    %215 = vmatpush2.msra.mxu0 0.0
    %216 = vmatprep.subr.mxu0 0.0
    %217 = vmatpush2.msra.mxu0 0.0
    %218 = vmatprep.subr.mxu0 0.0
    %219 = vmatpush2.msra.mxu0 0.0
    %220 = vmatprep.subr.mxu0 0.0
    %221 = vmatpush2.msra.mxu0 0.0
    %222 = vmatprep.subr.mxu0 0.0
    %223 = vmatpush2.msra.mxu0 0.0
    %224 = vmatprep.subr.mxu0 0.0
    %225 = vmatpush2.msra.mxu0 0.0
    %226 = vmatprep.subr.mxu0 0.0
    %227 = vmatpush2.msra.mxu0 0.0
    %228 = vmatprep.subr.mxu0 0.0
    %229 = vmatpush2.msra.mxu0 0.0
    %230 = vmatprep.subr.mxu0 0.0
    %231 = vmatpush2.msra.mxu0 0.0
    %232 = vmatprep.mubr.f32.mxu0 0.0
    %233 = vmatmul.mubr.f32.gmra.mxu0 %v163
    %v234 = vpop.f32.mrf.mxu0
    %v235 = vadd.f32 0.0, %v234
    %v236 = vpop.f32.mrf.mxu0
    %237 = vmatprep.mubr.f32.mxu0 0.0
    %238 = vmatmul.mubr.f32.gmra.mxu0 %v166
    %v239 = vpop.f32.mrf.mxu0
    %v240 = vadd.f32 0.0, %v239
    %v241 = vpop.f32.mrf.mxu0
    %242 = vdwg.mxu0
    %v243 = vld [vmem:[#allocation11] sm:$0xff]
    %v244 = vld [vmem:[#allocation11 + $0x8] sm:$0xff]
    %v245 = vld [vmem:[#allocation11 + $0x10] sm:$0xff]
    %v246 = vld [vmem:[#allocation11 + $0x18] sm:$0xff]
    %v248 = vsel %vm161, %v153, 0
    %v251 = vsel %vm161, %v154, 0
    %253 = vmatprep.subr.mxu0 0.0
    %254 = vmatpush1.msra.mxu0 0.0
    %255 = vmatprep.subr.mxu0 0.0
    %256 = vmatpush1.msra.mxu0 0.0
    %257 = vmatprep.subr.mxu0 0.0
    %258 = vmatpush1.msra.mxu0 0.0
    %259 = vmatprep.subr.mxu0 0.0
    %260 = vmatpush1.msra.mxu0 0.0
    %261 = vmatprep.subr.mxu0 0.0
    %262 = vmatpush1.msra.mxu0 0.0
    %263 = vmatprep.subr.mxu0 0.0
    %264 = vmatpush1.msra.mxu0 0.0
    %265 = vmatprep.subr.mxu0 0.0
    %266 = vmatpush1.msra.mxu0 0.0
    %267 = vmatprep.subr.mxu0 0.0
    %268 = vmatpush1.msra.mxu0 0.0
    %269 = vmatprep.subr.mxu0 0.0
    %270 = vmatpush1.msra.mxu0 0.0
    %271 = vmatprep.subr.mxu0 0.0
    %272 = vmatpush1.msra.mxu0 0.0
    %273 = vmatprep.subr.mxu0 0.0
    %274 = vmatpush1.msra.mxu0 0.0
    %275 = vmatprep.subr.mxu0 0.0
    %276 = vmatpush1.msra.mxu0 0.0
    %277 = vmatprep.subr.mxu0 0.0
    %278 = vmatpush1.msra.mxu0 %v246
    %279 = vmatprep.subr.mxu0 0.0
    %280 = vmatpush1.msra.mxu0 %v245
    %281 = vmatprep.subr.mxu0 0.0
    %282 = vmatpush1.msra.mxu0 %v244
    %283 = vmatprep.subr.mxu0 0.0
    %284 = vmatpush1.msra.mxu0 %v243
    %285 = vmatprep.subr.mxu0 0.0
    %286 = vmatpush2.msra.mxu0 0.0
    %287 = vmatprep.subr.mxu0 0.0
    %288 = vmatpush2.msra.mxu0 0.0
    %289 = vmatprep.subr.mxu0 0.0
    %290 = vmatpush2.msra.mxu0 0.0
    %291 = vmatprep.subr.mxu0 0.0
    %292 = vmatpush2.msra.mxu0 0.0
    %293 = vmatprep.subr.mxu0 0.0
    %294 = vmatpush2.msra.mxu0 0.0
    %295 = vmatprep.subr.mxu0 0.0
    %296 = vmatpush2.msra.mxu0 0.0
    %297 = vmatprep.subr.mxu0 0.0
    %298 = vmatpush2.msra.mxu0 0.0
    %299 = vmatprep.subr.mxu0 0.0
    %300 = vmatpush2.msra.mxu0 0.0
    %301 = vmatprep.subr.mxu0 0.0
    %302 = vmatpush2.msra.mxu0 0.0
    %303 = vmatprep.subr.mxu0 0.0
    %304 = vmatpush2.msra.mxu0 0.0
    %305 = vmatprep.subr.mxu0 0.0
    %306 = vmatpush2.msra.mxu0 0.0
    %307 = vmatprep.subr.mxu0 0.0
    %308 = vmatpush2.msra.mxu0 0.0
    %309 = vmatprep.subr.mxu0 0.0
    %310 = vmatpush2.msra.mxu0 0.0
    %311 = vmatprep.subr.mxu0 0.0
    %312 = vmatpush2.msra.mxu0 0.0
    %313 = vmatprep.subr.mxu0 0.0
    %314 = vmatpush2.msra.mxu0 0.0
    %315 = vmatprep.subr.mxu0 0.0
    %316 = vmatpush2.msra.mxu0 0.0
    %317 = vmatprep.mubr.f32.mxu0 0.0
    %318 = vmatmul.mubr.f32.gmra.mxu0 %v248
    %v319 = vpop.f32.mrf.mxu0
    %v320 = vadd.f32 0.0, %v319
    %v321 = vpop.f32.mrf.mxu0
    %322 = vmatprep.mubr.f32.mxu0 0.0
    %323 = vmatmul.mubr.f32.gmra.mxu0 %v251
    %v324 = vpop.f32.mrf.mxu0
    %v325 = vadd.f32 0.0, %v324
    %v326 = vpop.f32.mrf.mxu0
    %327 = vdwg.mxu0
    %v328 = vld [vmem:[#allocation13] sm:$0xff]
    %v329 = vld [vmem:[#allocation13 + $0x8] sm:$0xff]
    %v330 = vld [vmem:[#allocation13 + $0x10] sm:$0xff]
    %v331 = vld [vmem:[#allocation13 + $0x18] sm:$0xff]
    %v333 = vsel %vm161, %v155, 0
    %v336 = vsel %vm161, %v156, 0
    %338 = vmatprep.subr.mxu0 0.0
    %339 = vmatpush1.msra.mxu0 0.0
    %340 = vmatprep.subr.mxu0 0.0
    %341 = vmatpush1.msra.mxu0 0.0
    %342 = vmatprep.subr.mxu0 0.0
    %343 = vmatpush1.msra.mxu0 0.0
    %344 = vmatprep.subr.mxu0 0.0
    %345 = vmatpush1.msra.mxu0 0.0
    %346 = vmatprep.subr.mxu0 0.0
    %347 = vmatpush1.msra.mxu0 0.0
    %348 = vmatprep.subr.mxu0 0.0
    %349 = vmatpush1.msra.mxu0 0.0
    %350 = vmatprep.subr.mxu0 0.0
    %351 = vmatpush1.msra.mxu0 0.0
    %352 = vmatprep.subr.mxu0 0.0
    %353 = vmatpush1.msra.mxu0 0.0
    %354 = vmatprep.subr.mxu0 0.0
    %355 = vmatpush1.msra.mxu0 0.0
    %356 = vmatprep.subr.mxu0 0.0
    %357 = vmatpush1.msra.mxu0 0.0
    %358 = vmatprep.subr.mxu0 0.0
    %359 = vmatpush1.msra.mxu0 0.0
    %360 = vmatprep.subr.mxu0 0.0
    %361 = vmatpush1.msra.mxu0 0.0
    %362 = vmatprep.subr.mxu0 0.0
    %363 = vmatpush1.msra.mxu0 %v331
    %364 = vmatprep.subr.mxu0 0.0
    %365 = vmatpush1.msra.mxu0 %v330
    %366 = vmatprep.subr.mxu0 0.0
    %367 = vmatpush1.msra.mxu0 %v329
    %368 = vmatprep.subr.mxu0 0.0
    %369 = vmatpush1.msra.mxu0 %v328
    %370 = vmatprep.subr.mxu0 0.0
    %371 = vmatpush2.msra.mxu0 0.0
    %372 = vmatprep.subr.mxu0 0.0
    %373 = vmatpush2.msra.mxu0 0.0
    %374 = vmatprep.subr.mxu0 0.0
    %375 = vmatpush2.msra.mxu0 0.0
    %376 = vmatprep.subr.mxu0 0.0
    %377 = vmatpush2.msra.mxu0 0.0
    %378 = vmatprep.subr.mxu0 0.0
    %379 = vmatpush2.msra.mxu0 0.0
    %380 = vmatprep.subr.mxu0 0.0
    %381 = vmatpush2.msra.mxu0 0.0
    %382 = vmatprep.subr.mxu0 0.0
    %383 = vmatpush2.msra.mxu0 0.0
    %384 = vmatprep.subr.mxu0 0.0
    %385 = vmatpush2.msra.mxu0 0.0
    %386 = vmatprep.subr.mxu0 0.0
    %387 = vmatpush2.msra.mxu0 0.0
    %388 = vmatprep.subr.mxu0 0.0
    %389 = vmatpush2.msra.mxu0 0.0
    %390 = vmatprep.subr.mxu0 0.0
    %391 = vmatpush2.msra.mxu0 0.0
    %392 = vmatprep.subr.mxu0 0.0
    %393 = vmatpush2.msra.mxu0 0.0
    %394 = vmatprep.subr.mxu0 0.0
    %395 = vmatpush2.msra.mxu0 0.0
    %396 = vmatprep.subr.mxu0 0.0
    %397 = vmatpush2.msra.mxu0 0.0
    %398 = vmatprep.subr.mxu0 0.0
    %399 = vmatpush2.msra.mxu0 0.0
    %400 = vmatprep.subr.mxu0 0.0
    %401 = vmatpush2.msra.mxu0 0.0
    %402 = vmatprep.mubr.f32.mxu0 0.0
    %403 = vmatmul.mubr.f32.gmra.mxu0 %v333
    %v404 = vpop.f32.mrf.mxu0
    %v405 = vadd.f32 0.0, %v404
    %v406 = vpop.f32.mrf.mxu0
    %407 = vmatprep.mubr.f32.mxu0 0.0
    %408 = vmatmul.mubr.f32.gmra.mxu0 %v336
    %v409 = vpop.f32.mrf.mxu0
    %v410 = vadd.f32 0.0, %v409
    %v411 = vpop.f32.mrf.mxu0
    %412 = vdwg.mxu0
    %v413 = vmul.f32 %v235, 0.35355338
    %v414 = vmul.f32 %v240, 0.35355338
    %v415 = vld [vmem:[#allocation8] sm:$0xff]
    %vm416 = vcmp.ne.s32.totalorder %v415, 0
    %vm417 = vcmask 64512
    %v419 = vsel %vm417, %v413, 0
    %v422 = vsel %vm417, %v320, 0
    %424 = vmatprep.subr.mxu0 0.0
    %425 = vmatpush1.xpose.msra.mxu0 0.0
    %426 = vmatprep.subr.mxu0 0.0
    %427 = vmatpush1.xpose.msra.mxu0 0.0
    %428 = vmatprep.subr.mxu0 0.0
    %429 = vmatpush1.xpose.msra.mxu0 0.0
    %430 = vmatprep.subr.mxu0 0.0
    %431 = vmatpush1.xpose.msra.mxu0 0.0
    %432 = vmatprep.subr.mxu0 0.0
    %433 = vmatpush1.xpose.msra.mxu0 0.0
    %434 = vmatprep.subr.mxu0 0.0
    %435 = vmatpush1.xpose.msra.mxu0 0.0
    %436 = vmatprep.subr.mxu0 0.0
    %437 = vmatpush1.xpose.msra.mxu0 0.0
    %438 = vmatprep.subr.mxu0 0.0
    %439 = vmatpush1.xpose.msra.mxu0 0.0
    %440 = vmatprep.subr.mxu0 0.0
    %441 = vmatpush1.xpose.msra.mxu0 0.0
    %442 = vmatprep.subr.mxu0 0.0
    %443 = vmatpush1.xpose.msra.mxu0 0.0
    %444 = vmatprep.subr.mxu0 0.0
    %445 = vmatpush1.xpose.msra.mxu0 0.0
    %446 = vmatprep.subr.mxu0 0.0
    %447 = vmatpush1.xpose.msra.mxu0 0.0
    %448 = vmatprep.subr.mxu0 0.0
    %449 = vmatpush1.xpose.msra.mxu0 0.0
    %450 = vmatprep.subr.mxu0 0.0
    %451 = vmatpush1.xpose.msra.mxu0 0.0
    %452 = vmatprep.subr.mxu0 0.0
    %453 = vmatpush1.xpose.msra.mxu0 0.0
    %454 = vmatprep.subr.mxu0 0.0
    %455 = vmatpush1.xpose.msra.mxu0 %v422
    %456 = vmatprep.subr.mxu0 0.0
    %457 = vmatpush2.xpose.msra.mxu0 0.0
    %458 = vmatprep.subr.mxu0 0.0
    %459 = vmatpush2.xpose.msra.mxu0 0.0
    %460 = vmatprep.subr.mxu0 0.0
    %461 = vmatpush2.xpose.msra.mxu0 0.0
    %462 = vmatprep.subr.mxu0 0.0
    %463 = vmatpush2.xpose.msra.mxu0 0.0
    %464 = vmatprep.subr.mxu0 0.0
    %465 = vmatpush2.xpose.msra.mxu0 0.0
    %466 = vmatprep.subr.mxu0 0.0
    %467 = vmatpush2.xpose.msra.mxu0 0.0
    %468 = vmatprep.subr.mxu0 0.0
    %469 = vmatpush2.xpose.msra.mxu0 0.0
    %470 = vmatprep.subr.mxu0 0.0
    %471 = vmatpush2.xpose.msra.mxu0 0.0
    %472 = vmatprep.subr.mxu0 0.0
    %473 = vmatpush2.xpose.msra.mxu0 0.0
    %474 = vmatprep.subr.mxu0 0.0
    %475 = vmatpush2.xpose.msra.mxu0 0.0
    %476 = vmatprep.subr.mxu0 0.0
    %477 = vmatpush2.xpose.msra.mxu0 0.0
    %478 = vmatprep.subr.mxu0 0.0
    %479 = vmatpush2.xpose.msra.mxu0 0.0
    %480 = vmatprep.subr.mxu0 0.0
    %481 = vmatpush2.xpose.msra.mxu0 0.0
    %482 = vmatprep.subr.mxu0 0.0
    %483 = vmatpush2.xpose.msra.mxu0 0.0
    %484 = vmatprep.subr.mxu0 0.0
    %485 = vmatpush2.xpose.msra.mxu0 0.0
    %486 = vmatprep.subr.mxu0 0.0
    %487 = vmatpush2.xpose.msra.mxu0 0.0
    %488 = vmatprep.mubr.f32.mxu0 0.0
    %489 = vmatmul.mubr.f32.gmra.mxu0 %v419
    %v490 = vpop.f32.mrf.mxu0
    %v491 = vadd.f32 0.0, %v490
    %v492 = vpop.f32.mrf.mxu0
    %493 = vdwg.mxu0
    %v494 = vsel %vm416, -1e+10, %v491
    %v495 = vsel %vm417, %v494, -inf
    %496 = vmax.xlane.f32.xlu0 %v495
    %v497 = vpop.xlane.xlu0 %496
    %v498 = vsub.f32 %v494, %v497
    %v499 = vmul.f32 %v498, 1.442695
    %v500 = vpow.pop %v499
    %v501 = vsel %vm417, %v500, 0.0
    %502 = vadd.xlane.f32.xlu0 %v501
    %v503 = vpop.xlane.xlu0 %502
    %v504 = vrcp.pop %v503
    %v505 = vmul.f32 %v500, %v504
    %v507 = vsel %vm417, %v505, 0
    %509 = vmatprep.subr.mxu0 0.0
    %510 = vmatpush1.msra.mxu0 0.0
    %511 = vmatprep.subr.mxu0 0.0
    %512 = vmatpush1.msra.mxu0 0.0
    %513 = vmatprep.subr.mxu0 0.0
    %514 = vmatpush1.msra.mxu0 0.0
    %515 = vmatprep.subr.mxu0 0.0
    %516 = vmatpush1.msra.mxu0 0.0
    %517 = vmatprep.subr.mxu0 0.0
    %518 = vmatpush1.msra.mxu0 0.0
    %519 = vmatprep.subr.mxu0 0.0
    %520 = vmatpush1.msra.mxu0 0.0
    %521 = vmatprep.subr.mxu0 0.0
    %522 = vmatpush1.msra.mxu0 0.0
    %523 = vmatprep.subr.mxu0 0.0
    %524 = vmatpush1.msra.mxu0 0.0
    %525 = vmatprep.subr.mxu0 0.0
    %526 = vmatpush1.msra.mxu0 0.0
    %527 = vmatprep.subr.mxu0 0.0
    %528 = vmatpush1.msra.mxu0 0.0
    %529 = vmatprep.subr.mxu0 0.0
    %530 = vmatpush1.msra.mxu0 0.0
    %531 = vmatprep.subr.mxu0 0.0
    %532 = vmatpush1.msra.mxu0 0.0
    %533 = vmatprep.subr.mxu0 0.0
    %534 = vmatpush1.msra.mxu0 0.0
    %535 = vmatprep.subr.mxu0 0.0
    %536 = vmatpush1.msra.mxu0 0.0
    %537 = vmatprep.subr.mxu0 0.0
    %538 = vmatpush1.msra.mxu0 0.0
    %539 = vmatprep.subr.mxu0 0.0
    %540 = vmatpush1.msra.mxu0 %v405
    %541 = vmatprep.subr.mxu0 0.0
    %542 = vmatpush2.msra.mxu0 0.0
    %543 = vmatprep.subr.mxu0 0.0
    %544 = vmatpush2.msra.mxu0 0.0
    %545 = vmatprep.subr.mxu0 0.0
    %546 = vmatpush2.msra.mxu0 0.0
    %547 = vmatprep.subr.mxu0 0.0
    %548 = vmatpush2.msra.mxu0 0.0
    %549 = vmatprep.subr.mxu0 0.0
    %550 = vmatpush2.msra.mxu0 0.0
    %551 = vmatprep.subr.mxu0 0.0
    %552 = vmatpush2.msra.mxu0 0.0
    %553 = vmatprep.subr.mxu0 0.0
    %554 = vmatpush2.msra.mxu0 0.0
    %555 = vmatprep.subr.mxu0 0.0
    %556 = vmatpush2.msra.mxu0 0.0
    %557 = vmatprep.subr.mxu0 0.0
    %558 = vmatpush2.msra.mxu0 0.0
    %559 = vmatprep.subr.mxu0 0.0
    %560 = vmatpush2.msra.mxu0 0.0
    %561 = vmatprep.subr.mxu0 0.0
    %562 = vmatpush2.msra.mxu0 0.0
    %563 = vmatprep.subr.mxu0 0.0
    %564 = vmatpush2.msra.mxu0 0.0
    %565 = vmatprep.subr.mxu0 0.0
    %566 = vmatpush2.msra.mxu0 0.0
    %567 = vmatprep.subr.mxu0 0.0
    %568 = vmatpush2.msra.mxu0 0.0
    %569 = vmatprep.subr.mxu0 0.0
    %570 = vmatpush2.msra.mxu0 0.0
    %571 = vmatprep.subr.mxu0 0.0
    %572 = vmatpush2.msra.mxu0 0.0
    %573 = vmatprep.mubr.f32.mxu0 0.0
    %574 = vmatmul.mubr.f32.gmra.mxu0 %v507
    %v575 = vpop.f32.mrf.mxu0
    %v576 = vadd.f32 0.0, %v575
    %v577 = vpop.f32.mrf.mxu0
    %578 = vdwg.mxu0
    %579 = vrot.lane.b32.xlu0 %v413, 120
    %v580 = vpop.permute.xlu0 %579
    %581 = vrot.lane.b32.xlu0 %v320, 120
    %v582 = vpop.permute.xlu0 %581
    %v583 = vsel %vm417, %v580, 0
    %v585 = vsel %vm417, %v582, 0
    %587 = vmatprep.subr.mxu0 0.0
    %588 = vmatpush1.xpose.msra.mxu0 0.0
    %589 = vmatprep.subr.mxu0 0.0
    %590 = vmatpush1.xpose.msra.mxu0 0.0
    %591 = vmatprep.subr.mxu0 0.0
    %592 = vmatpush1.xpose.msra.mxu0 0.0
    %593 = vmatprep.subr.mxu0 0.0
    %594 = vmatpush1.xpose.msra.mxu0 0.0
    %595 = vmatprep.subr.mxu0 0.0
    %596 = vmatpush1.xpose.msra.mxu0 0.0
    %597 = vmatprep.subr.mxu0 0.0
    %598 = vmatpush1.xpose.msra.mxu0 0.0
    %599 = vmatprep.subr.mxu0 0.0
    %600 = vmatpush1.xpose.msra.mxu0 0.0
    %601 = vmatprep.subr.mxu0 0.0
    %602 = vmatpush1.xpose.msra.mxu0 0.0
    %603 = vmatprep.subr.mxu0 0.0
    %604 = vmatpush1.xpose.msra.mxu0 0.0
    %605 = vmatprep.subr.mxu0 0.0
    %606 = vmatpush1.xpose.msra.mxu0 0.0
    %607 = vmatprep.subr.mxu0 0.0
    %608 = vmatpush1.xpose.msra.mxu0 0.0
    %609 = vmatprep.subr.mxu0 0.0
    %610 = vmatpush1.xpose.msra.mxu0 0.0
    %611 = vmatprep.subr.mxu0 0.0
    %612 = vmatpush1.xpose.msra.mxu0 0.0
    %613 = vmatprep.subr.mxu0 0.0
    %614 = vmatpush1.xpose.msra.mxu0 0.0
    %615 = vmatprep.subr.mxu0 0.0
    %616 = vmatpush1.xpose.msra.mxu0 0.0
    %617 = vmatprep.subr.mxu0 0.0
    %618 = vmatpush1.xpose.msra.mxu0 %v585
    %619 = vmatprep.subr.mxu0 0.0
    %620 = vmatpush2.xpose.msra.mxu0 0.0
    %621 = vmatprep.subr.mxu0 0.0
    %622 = vmatpush2.xpose.msra.mxu0 0.0
    %623 = vmatprep.subr.mxu0 0.0
    %624 = vmatpush2.xpose.msra.mxu0 0.0
    %625 = vmatprep.subr.mxu0 0.0
    %626 = vmatpush2.xpose.msra.mxu0 0.0
    %627 = vmatprep.subr.mxu0 0.0
    %628 = vmatpush2.xpose.msra.mxu0 0.0
    %629 = vmatprep.subr.mxu0 0.0
    %630 = vmatpush2.xpose.msra.mxu0 0.0
    %631 = vmatprep.subr.mxu0 0.0
    %632 = vmatpush2.xpose.msra.mxu0 0.0
    %633 = vmatprep.subr.mxu0 0.0
    %634 = vmatpush2.xpose.msra.mxu0 0.0
    %635 = vmatprep.subr.mxu0 0.0
    %636 = vmatpush2.xpose.msra.mxu0 0.0
    %637 = vmatprep.subr.mxu0 0.0
    %638 = vmatpush2.xpose.msra.mxu0 0.0
    %639 = vmatprep.subr.mxu0 0.0
    %640 = vmatpush2.xpose.msra.mxu0 0.0
    %641 = vmatprep.subr.mxu0 0.0
    %642 = vmatpush2.xpose.msra.mxu0 0.0
    %643 = vmatprep.subr.mxu0 0.0
    %644 = vmatpush2.xpose.msra.mxu0 0.0
    %645 = vmatprep.subr.mxu0 0.0
    %646 = vmatpush2.xpose.msra.mxu0 0.0
    %647 = vmatprep.subr.mxu0 0.0
    %648 = vmatpush2.xpose.msra.mxu0 0.0
    %649 = vmatprep.subr.mxu0 0.0
    %650 = vmatpush2.xpose.msra.mxu0 0.0
    %651 = vmatprep.mubr.f32.mxu0 0.0
    %652 = vmatmul.mubr.f32.gmra.mxu0 %v583
    %v653 = vpop.f32.mrf.mxu0
    %v654 = vadd.f32 0.0, %v653
    %v655 = vpop.f32.mrf.mxu0
    %656 = vdwg.mxu0
    %v657 = vsel %vm416, -1e+10, %v654
    %v658 = vsel %vm417, %v657, -inf
    %659 = vmax.xlane.f32.xlu0 %v658
    %v660 = vpop.xlane.xlu0 %659
    %v661 = vsub.f32 %v657, %v660
    %v662 = vmul.f32 %v661, 1.442695
    %v663 = vpow.pop %v662
    %v664 = vsel %vm417, %v663, 0.0
    %665 = vadd.xlane.f32.xlu0 %v664
    %v666 = vpop.xlane.xlu0 %665
    %v667 = vrcp.pop %v666
    %v668 = vmul.f32 %v663, %v667
    %670 = vrot.lane.b32.xlu0 %v405, 120
    %v671 = vpop.permute.xlu0 %670
    %v674 = vsel %vm417, %v668, 0
    %676 = vmatprep.subr.mxu0 0.0
    %677 = vmatpush1.msra.mxu0 0.0
    %678 = vmatprep.subr.mxu0 0.0
    %679 = vmatpush1.msra.mxu0 0.0
    %680 = vmatprep.subr.mxu0 0.0
    %681 = vmatpush1.msra.mxu0 0.0
    %682 = vmatprep.subr.mxu0 0.0
    %683 = vmatpush1.msra.mxu0 0.0
    %684 = vmatprep.subr.mxu0 0.0
    %685 = vmatpush1.msra.mxu0 0.0
    %686 = vmatprep.subr.mxu0 0.0
    %687 = vmatpush1.msra.mxu0 0.0
    %688 = vmatprep.subr.mxu0 0.0
    %689 = vmatpush1.msra.mxu0 0.0
    %690 = vmatprep.subr.mxu0 0.0
    %691 = vmatpush1.msra.mxu0 0.0
    %692 = vmatprep.subr.mxu0 0.0
    %693 = vmatpush1.msra.mxu0 0.0
    %694 = vmatprep.subr.mxu0 0.0
    %695 = vmatpush1.msra.mxu0 0.0
    %696 = vmatprep.subr.mxu0 0.0
    %697 = vmatpush1.msra.mxu0 0.0
    %698 = vmatprep.subr.mxu0 0.0
    %699 = vmatpush1.msra.mxu0 0.0
    %700 = vmatprep.subr.mxu0 0.0
    %701 = vmatpush1.msra.mxu0 0.0
    %702 = vmatprep.subr.mxu0 0.0
    %703 = vmatpush1.msra.mxu0 0.0
    %704 = vmatprep.subr.mxu0 0.0
    %705 = vmatpush1.msra.mxu0 0.0
    %706 = vmatprep.subr.mxu0 0.0
    %707 = vmatpush1.msra.mxu0 %v671
    %708 = vmatprep.subr.mxu0 0.0
    %709 = vmatpush2.msra.mxu0 0.0
    %710 = vmatprep.subr.mxu0 0.0
    %711 = vmatpush2.msra.mxu0 0.0
    %712 = vmatprep.subr.mxu0 0.0
    %713 = vmatpush2.msra.mxu0 0.0
    %714 = vmatprep.subr.mxu0 0.0
    %715 = vmatpush2.msra.mxu0 0.0
    %716 = vmatprep.subr.mxu0 0.0
    %717 = vmatpush2.msra.mxu0 0.0
    %718 = vmatprep.subr.mxu0 0.0
    %719 = vmatpush2.msra.mxu0 0.0
    %720 = vmatprep.subr.mxu0 0.0
    %721 = vmatpush2.msra.mxu0 0.0
    %722 = vmatprep.subr.mxu0 0.0
    %723 = vmatpush2.msra.mxu0 0.0
    %724 = vmatprep.subr.mxu0 0.0
    %725 = vmatpush2.msra.mxu0 0.0
    %726 = vmatprep.subr.mxu0 0.0
    %727 = vmatpush2.msra.mxu0 0.0
    %728 = vmatprep.subr.mxu0 0.0
    %729 = vmatpush2.msra.mxu0 0.0
    %730 = vmatprep.subr.mxu0 0.0
    %731 = vmatpush2.msra.mxu0 0.0
    %732 = vmatprep.subr.mxu0 0.0
    %733 = vmatpush2.msra.mxu0 0.0
    %734 = vmatprep.subr.mxu0 0.0
    %735 = vmatpush2.msra.mxu0 0.0
    %736 = vmatprep.subr.mxu0 0.0
    %737 = vmatpush2.msra.mxu0 0.0
    %738 = vmatprep.subr.mxu0 0.0
    %739 = vmatpush2.msra.mxu0 0.0
    %740 = vmatprep.mubr.f32.mxu0 0.0
    %741 = vmatmul.mubr.f32.gmra.mxu0 %v674
    %v742 = vpop.f32.mrf.mxu0
    %v743 = vadd.f32 0.0, %v742
    %v744 = vpop.f32.mrf.mxu0
    %745 = vdwg.mxu0
    %746 = vrot.lane.b32.xlu0 %v413, 112
    %v747 = vpop.permute.xlu0 %746
    %748 = vrot.lane.b32.xlu0 %v320, 112
    %v749 = vpop.permute.xlu0 %748
    %v750 = vsel %vm417, %v747, 0
    %v752 = vsel %vm417, %v749, 0
    %754 = vmatprep.subr.mxu0 0.0
    %755 = vmatpush1.xpose.msra.mxu0 0.0
    %756 = vmatprep.subr.mxu0 0.0
    %757 = vmatpush1.xpose.msra.mxu0 0.0
    %758 = vmatprep.subr.mxu0 0.0
    %759 = vmatpush1.xpose.msra.mxu0 0.0
    %760 = vmatprep.subr.mxu0 0.0
    %761 = vmatpush1.xpose.msra.mxu0 0.0
    %762 = vmatprep.subr.mxu0 0.0
    %763 = vmatpush1.xpose.msra.mxu0 0.0
    %764 = vmatprep.subr.mxu0 0.0
    %765 = vmatpush1.xpose.msra.mxu0 0.0
    %766 = vmatprep.subr.mxu0 0.0
    %767 = vmatpush1.xpose.msra.mxu0 0.0
    %768 = vmatprep.subr.mxu0 0.0
    %769 = vmatpush1.xpose.msra.mxu0 0.0
    %770 = vmatprep.subr.mxu0 0.0
    %771 = vmatpush1.xpose.msra.mxu0 0.0
    %772 = vmatprep.subr.mxu0 0.0
    %773 = vmatpush1.xpose.msra.mxu0 0.0
    %774 = vmatprep.subr.mxu0 0.0
    %775 = vmatpush1.xpose.msra.mxu0 0.0
    %776 = vmatprep.subr.mxu0 0.0
    %777 = vmatpush1.xpose.msra.mxu0 0.0
    %778 = vmatprep.subr.mxu0 0.0
    %779 = vmatpush1.xpose.msra.mxu0 0.0
    %780 = vmatprep.subr.mxu0 0.0
    %781 = vmatpush1.xpose.msra.mxu0 0.0
    %782 = vmatprep.subr.mxu0 0.0
    %783 = vmatpush1.xpose.msra.mxu0 0.0
    %784 = vmatprep.subr.mxu0 0.0
    %785 = vmatpush1.xpose.msra.mxu0 %v752
    %786 = vmatprep.subr.mxu0 0.0
    %787 = vmatpush2.xpose.msra.mxu0 0.0
    %788 = vmatprep.subr.mxu0 0.0
    %789 = vmatpush2.xpose.msra.mxu0 0.0
    %790 = vmatprep.subr.mxu0 0.0
    %791 = vmatpush2.xpose.msra.mxu0 0.0
    %792 = vmatprep.subr.mxu0 0.0
    %793 = vmatpush2.xpose.msra.mxu0 0.0
    %794 = vmatprep.subr.mxu0 0.0
    %795 = vmatpush2.xpose.msra.mxu0 0.0
    %796 = vmatprep.subr.mxu0 0.0
    %797 = vmatpush2.xpose.msra.mxu0 0.0
    %798 = vmatprep.subr.mxu0 0.0
    %799 = vmatpush2.xpose.msra.mxu0 0.0
    %800 = vmatprep.subr.mxu0 0.0
    %801 = vmatpush2.xpose.msra.mxu0 0.0
    %802 = vmatprep.subr.mxu0 0.0
    %803 = vmatpush2.xpose.msra.mxu0 0.0
    %804 = vmatprep.subr.mxu0 0.0
    %805 = vmatpush2.xpose.msra.mxu0 0.0
    %806 = vmatprep.subr.mxu0 0.0
    %807 = vmatpush2.xpose.msra.mxu0 0.0
    %808 = vmatprep.subr.mxu0 0.0
    %809 = vmatpush2.xpose.msra.mxu0 0.0
    %810 = vmatprep.subr.mxu0 0.0
    %811 = vmatpush2.xpose.msra.mxu0 0.0
    %812 = vmatprep.subr.mxu0 0.0
    %813 = vmatpush2.xpose.msra.mxu0 0.0
    %814 = vmatprep.subr.mxu0 0.0
    %815 = vmatpush2.xpose.msra.mxu0 0.0
    %816 = vmatprep.subr.mxu0 0.0
    %817 = vmatpush2.xpose.msra.mxu0 0.0
    %818 = vmatprep.mubr.f32.mxu0 0.0
    %819 = vmatmul.mubr.f32.gmra.mxu0 %v750
    %v820 = vpop.f32.mrf.mxu0
    %v821 = vadd.f32 0.0, %v820
    %v822 = vpop.f32.mrf.mxu0
    %823 = vdwg.mxu0
    %v824 = vsel %vm416, -1e+10, %v821
    %v825 = vsel %vm417, %v824, -inf
    %826 = vmax.xlane.f32.xlu0 %v825
    %v827 = vpop.xlane.xlu0 %826
    %v828 = vsub.f32 %v824, %v827
    %v829 = vmul.f32 %v828, 1.442695
    %v830 = vpow.pop %v829
    %v831 = vsel %vm417, %v830, 0.0
    %832 = vadd.xlane.f32.xlu0 %v831
    %v833 = vpop.xlane.xlu0 %832
    %v834 = vrcp.pop %v833
    %v835 = vmul.f32 %v830, %v834
    %836 = vrot.lane.b32.xlu0 %v405, 112
    %v837 = vpop.permute.xlu0 %836
    %v840 = vsel %vm417, %v835, 0
    %842 = vmatprep.subr.mxu0 0.0
    %843 = vmatpush1.msra.mxu0 0.0
    %844 = vmatprep.subr.mxu0 0.0
    %845 = vmatpush1.msra.mxu0 0.0
    %846 = vmatprep.subr.mxu0 0.0
    %847 = vmatpush1.msra.mxu0 0.0
    %848 = vmatprep.subr.mxu0 0.0
    %849 = vmatpush1.msra.mxu0 0.0
    %850 = vmatprep.subr.mxu0 0.0
    %851 = vmatpush1.msra.mxu0 0.0
    %852 = vmatprep.subr.mxu0 0.0
    %853 = vmatpush1.msra.mxu0 0.0
    %854 = vmatprep.subr.mxu0 0.0
    %855 = vmatpush1.msra.mxu0 0.0
    %856 = vmatprep.subr.mxu0 0.0
    %857 = vmatpush1.msra.mxu0 0.0
    %858 = vmatprep.subr.mxu0 0.0
    %859 = vmatpush1.msra.mxu0 0.0
    %860 = vmatprep.subr.mxu0 0.0
    %861 = vmatpush1.msra.mxu0 0.0
    %862 = vmatprep.subr.mxu0 0.0
    %863 = vmatpush1.msra.mxu0 0.0
    %864 = vmatprep.subr.mxu0 0.0
    %865 = vmatpush1.msra.mxu0 0.0
    %866 = vmatprep.subr.mxu0 0.0
    %867 = vmatpush1.msra.mxu0 0.0
    %868 = vmatprep.subr.mxu0 0.0
    %869 = vmatpush1.msra.mxu0 0.0
    %870 = vmatprep.subr.mxu0 0.0
    %871 = vmatpush1.msra.mxu0 0.0
    %872 = vmatprep.subr.mxu0 0.0
    %873 = vmatpush1.msra.mxu0 %v837
    %874 = vmatprep.subr.mxu0 0.0
    %875 = vmatpush2.msra.mxu0 0.0
    %876 = vmatprep.subr.mxu0 0.0
    %877 = vmatpush2.msra.mxu0 0.0
    %878 = vmatprep.subr.mxu0 0.0
    %879 = vmatpush2.msra.mxu0 0.0
    %880 = vmatprep.subr.mxu0 0.0
    %881 = vmatpush2.msra.mxu0 0.0
    %882 = vmatprep.subr.mxu0 0.0
    %883 = vmatpush2.msra.mxu0 0.0
    %884 = vmatprep.subr.mxu0 0.0
    %885 = vmatpush2.msra.mxu0 0.0
    %886 = vmatprep.subr.mxu0 0.0
    %887 = vmatpush2.msra.mxu0 0.0
    %888 = vmatprep.subr.mxu0 0.0
    %889 = vmatpush2.msra.mxu0 0.0
    %890 = vmatprep.subr.mxu0 0.0
    %891 = vmatpush2.msra.mxu0 0.0
    %892 = vmatprep.subr.mxu0 0.0
    %893 = vmatpush2.msra.mxu0 0.0
    %894 = vmatprep.subr.mxu0 0.0
    %895 = vmatpush2.msra.mxu0 0.0
    %896 = vmatprep.subr.mxu0 0.0
    %897 = vmatpush2.msra.mxu0 0.0
    %898 = vmatprep.subr.mxu0 0.0
    %899 = vmatpush2.msra.mxu0 0.0
    %900 = vmatprep.subr.mxu0 0.0
    %901 = vmatpush2.msra.mxu0 0.0
    %902 = vmatprep.subr.mxu0 0.0
    %903 = vmatpush2.msra.mxu0 0.0
    %904 = vmatprep.subr.mxu0 0.0
    %905 = vmatpush2.msra.mxu0 0.0
    %906 = vmatprep.mubr.f32.mxu0 0.0
    %907 = vmatmul.mubr.f32.gmra.mxu0 %v840
    %v908 = vpop.f32.mrf.mxu0
    %v909 = vadd.f32 0.0, %v908
    %v910 = vpop.f32.mrf.mxu0
    %911 = vdwg.mxu0
    %912 = vrot.lane.b32.xlu0 %v413, 104
    %v913 = vpop.permute.xlu0 %912
    %914 = vrot.lane.b32.xlu0 %v320, 104
    %v915 = vpop.permute.xlu0 %914
    %v916 = vsel %vm417, %v913, 0
    %v918 = vsel %vm417, %v915, 0
    %920 = vmatprep.subr.mxu0 0.0
    %921 = vmatpush1.xpose.msra.mxu0 0.0
    %922 = vmatprep.subr.mxu0 0.0
    %923 = vmatpush1.xpose.msra.mxu0 0.0
    %924 = vmatprep.subr.mxu0 0.0
    %925 = vmatpush1.xpose.msra.mxu0 0.0
    %926 = vmatprep.subr.mxu0 0.0
    %927 = vmatpush1.xpose.msra.mxu0 0.0
    %928 = vmatprep.subr.mxu0 0.0
    %929 = vmatpush1.xpose.msra.mxu0 0.0
    %930 = vmatprep.subr.mxu0 0.0
    %931 = vmatpush1.xpose.msra.mxu0 0.0
    %932 = vmatprep.subr.mxu0 0.0
    %933 = vmatpush1.xpose.msra.mxu0 0.0
    %934 = vmatprep.subr.mxu0 0.0
    %935 = vmatpush1.xpose.msra.mxu0 0.0
    %936 = vmatprep.subr.mxu0 0.0
    %937 = vmatpush1.xpose.msra.mxu0 0.0
    %938 = vmatprep.subr.mxu0 0.0
    %939 = vmatpush1.xpose.msra.mxu0 0.0
    %940 = vmatprep.subr.mxu0 0.0
    %941 = vmatpush1.xpose.msra.mxu0 0.0
    %942 = vmatprep.subr.mxu0 0.0
    %943 = vmatpush1.xpose.msra.mxu0 0.0
    %944 = vmatprep.subr.mxu0 0.0
    %945 = vmatpush1.xpose.msra.mxu0 0.0
    %946 = vmatprep.subr.mxu0 0.0
    %947 = vmatpush1.xpose.msra.mxu0 0.0
    %948 = vmatprep.subr.mxu0 0.0
    %949 = vmatpush1.xpose.msra.mxu0 0.0
    %950 = vmatprep.subr.mxu0 0.0
    %951 = vmatpush1.xpose.msra.mxu0 %v918
    %952 = vmatprep.subr.mxu0 0.0
    %953 = vmatpush2.xpose.msra.mxu0 0.0
    %954 = vmatprep.subr.mxu0 0.0
    %955 = vmatpush2.xpose.msra.mxu0 0.0
    %956 = vmatprep.subr.mxu0 0.0
    %957 = vmatpush2.xpose.msra.mxu0 0.0
    %958 = vmatprep.subr.mxu0 0.0
    %959 = vmatpush2.xpose.msra.mxu0 0.0
    %960 = vmatprep.subr.mxu0 0.0
    %961 = vmatpush2.xpose.msra.mxu0 0.0
    %962 = vmatprep.subr.mxu0 0.0
    %963 = vmatpush2.xpose.msra.mxu0 0.0
    %964 = vmatprep.subr.mxu0 0.0
    %965 = vmatpush2.xpose.msra.mxu0 0.0
    %966 = vmatprep.subr.mxu0 0.0
    %967 = vmatpush2.xpose.msra.mxu0 0.0
    %968 = vmatprep.subr.mxu0 0.0
    %969 = vmatpush2.xpose.msra.mxu0 0.0
    %970 = vmatprep.subr.mxu0 0.0
    %971 = vmatpush2.xpose.msra.mxu0 0.0
    %972 = vmatprep.subr.mxu0 0.0
    %973 = vmatpush2.xpose.msra.mxu0 0.0
    %974 = vmatprep.subr.mxu0 0.0
    %975 = vmatpush2.xpose.msra.mxu0 0.0
    %976 = vmatprep.subr.mxu0 0.0
    %977 = vmatpush2.xpose.msra.mxu0 0.0
    %978 = vmatprep.subr.mxu0 0.0
    %979 = vmatpush2.xpose.msra.mxu0 0.0
    %980 = vmatprep.subr.mxu0 0.0
    %981 = vmatpush2.xpose.msra.mxu0 0.0
    %982 = vmatprep.subr.mxu0 0.0
    %983 = vmatpush2.xpose.msra.mxu0 0.0
    %984 = vmatprep.mubr.f32.mxu0 0.0
    %985 = vmatmul.mubr.f32.gmra.mxu0 %v916
    %v986 = vpop.f32.mrf.mxu0
    %v987 = vadd.f32 0.0, %v986
    %v988 = vpop.f32.mrf.mxu0
    %989 = vdwg.mxu0
    %v990 = vsel %vm416, -1e+10, %v987
    %v991 = vsel %vm417, %v990, -inf
    %992 = vmax.xlane.f32.xlu0 %v991
    %v993 = vpop.xlane.xlu0 %992
    %v994 = vsub.f32 %v990, %v993
    %v995 = vmul.f32 %v994, 1.442695
    %v996 = vpow.pop %v995
    %v997 = vsel %vm417, %v996, 0.0
    %998 = vadd.xlane.f32.xlu0 %v997
    %v999 = vpop.xlane.xlu0 %998
    %v1000 = vrcp.pop %v999
    %v1001 = vmul.f32 %v996, %v1000
    %1002 = vrot.lane.b32.xlu0 %v405, 104
    %v1003 = vpop.permute.xlu0 %1002
    %v1006 = vsel %vm417, %v1001, 0
    %1008 = vmatprep.subr.mxu0 0.0
    %1009 = vmatpush1.msra.mxu0 0.0
    %1010 = vmatprep.subr.mxu0 0.0
    %1011 = vmatpush1.msra.mxu0 0.0
    %1012 = vmatprep.subr.mxu0 0.0
    %1013 = vmatpush1.msra.mxu0 0.0
    %1014 = vmatprep.subr.mxu0 0.0
    %1015 = vmatpush1.msra.mxu0 0.0
    %1016 = vmatprep.subr.mxu0 0.0
    %1017 = vmatpush1.msra.mxu0 0.0
    %1018 = vmatprep.subr.mxu0 0.0
    %1019 = vmatpush1.msra.mxu0 0.0
    %1020 = vmatprep.subr.mxu0 0.0
    %1021 = vmatpush1.msra.mxu0 0.0
    %1022 = vmatprep.subr.mxu0 0.0
    %1023 = vmatpush1.msra.mxu0 0.0
    %1024 = vmatprep.subr.mxu0 0.0
    %1025 = vmatpush1.msra.mxu0 0.0
    %1026 = vmatprep.subr.mxu0 0.0
    %1027 = vmatpush1.msra.mxu0 0.0
    %1028 = vmatprep.subr.mxu0 0.0
    %1029 = vmatpush1.msra.mxu0 0.0
    %1030 = vmatprep.subr.mxu0 0.0
    %1031 = vmatpush1.msra.mxu0 0.0
    %1032 = vmatprep.subr.mxu0 0.0
    %1033 = vmatpush1.msra.mxu0 0.0
    %1034 = vmatprep.subr.mxu0 0.0
    %1035 = vmatpush1.msra.mxu0 0.0
    %1036 = vmatprep.subr.mxu0 0.0
    %1037 = vmatpush1.msra.mxu0 0.0
    %1038 = vmatprep.subr.mxu0 0.0
    %1039 = vmatpush1.msra.mxu0 %v1003
    %1040 = vmatprep.subr.mxu0 0.0
    %1041 = vmatpush2.msra.mxu0 0.0
    %1042 = vmatprep.subr.mxu0 0.0
    %1043 = vmatpush2.msra.mxu0 0.0
    %1044 = vmatprep.subr.mxu0 0.0
    %1045 = vmatpush2.msra.mxu0 0.0
    %1046 = vmatprep.subr.mxu0 0.0
    %1047 = vmatpush2.msra.mxu0 0.0
    %1048 = vmatprep.subr.mxu0 0.0
    %1049 = vmatpush2.msra.mxu0 0.0
    %1050 = vmatprep.subr.mxu0 0.0
    %1051 = vmatpush2.msra.mxu0 0.0
    %1052 = vmatprep.subr.mxu0 0.0
    %1053 = vmatpush2.msra.mxu0 0.0
    %1054 = vmatprep.subr.mxu0 0.0
    %1055 = vmatpush2.msra.mxu0 0.0
    %1056 = vmatprep.subr.mxu0 0.0
    %1057 = vmatpush2.msra.mxu0 0.0
    %1058 = vmatprep.subr.mxu0 0.0
    %1059 = vmatpush2.msra.mxu0 0.0
    %1060 = vmatprep.subr.mxu0 0.0
    %1061 = vmatpush2.msra.mxu0 0.0
    %1062 = vmatprep.subr.mxu0 0.0
    %1063 = vmatpush2.msra.mxu0 0.0
    %1064 = vmatprep.subr.mxu0 0.0
    %1065 = vmatpush2.msra.mxu0 0.0
    %1066 = vmatprep.subr.mxu0 0.0
    %1067 = vmatpush2.msra.mxu0 0.0
    %1068 = vmatprep.subr.mxu0 0.0
    %1069 = vmatpush2.msra.mxu0 0.0
    %1070 = vmatprep.subr.mxu0 0.0
    %1071 = vmatpush2.msra.mxu0 0.0
    %1072 = vmatprep.mubr.f32.mxu0 0.0
    %1073 = vmatmul.mubr.f32.gmra.mxu0 %v1006
    %v1074 = vpop.f32.mrf.mxu0
    %v1075 = vadd.f32 0.0, %v1074
    %v1076 = vpop.f32.mrf.mxu0
    %1077 = vdwg.mxu0
    %1079 = vrot.lane.b32.xlu0 %v743, 8
    %v1080 = vpop.permute.xlu0 %1079
    %1083 = vrot.lane.b32.xlu0 %v909, 16
    %v1084 = vpop.permute.xlu0 %1083
    %1087 = vrot.lane.b32.xlu0 %v1075, 24
    %v1088 = vpop.permute.xlu0 %1087
    %v1090 = vsel %vm417, %v576, %v1080
    %vm1091 = vcmask 130048
    %v1092 = vsel %vm1091, %v1090, %v1084
    %vm1093 = vcmask 195584
    %v1094 = vsel %vm1093, %v1092, %v1088
    %1095 = vrot.lane.b32.xlu0 %v668, 8
    %v1096 = vpop.permute.xlu0 %1095
    %1098 = vrot.lane.b32.xlu0 %v835, 16
    %v1099 = vpop.permute.xlu0 %1098
    %1101 = vrot.lane.b32.xlu0 %v1001, 24
    %v1102 = vpop.permute.xlu0 %1101
    %v1104 = vsel %vm417, %v505, %v1096
    %v1105 = vsel %vm1091, %v1104, %v1099
    %v1106 = vsel %vm1093, %v1105, %v1102
    %s1107 = scalar_lea.vmem [#allocation8], 8
    %v1108 = vld [vmem:[%s1107] sm:$0xff]
    %vm1109 = vcmp.ne.s32.totalorder %v1108, 0
    %v1111 = vsel %vm417, %v414, 0
    %v1114 = vsel %vm417, %v325, 0
    %1116 = vmatprep.subr.mxu0 0.0
    %1117 = vmatpush1.xpose.msra.mxu0 0.0
    %1118 = vmatprep.subr.mxu0 0.0
    %1119 = vmatpush1.xpose.msra.mxu0 0.0
    %1120 = vmatprep.subr.mxu0 0.0
    %1121 = vmatpush1.xpose.msra.mxu0 0.0
    %1122 = vmatprep.subr.mxu0 0.0
    %1123 = vmatpush1.xpose.msra.mxu0 0.0
    %1124 = vmatprep.subr.mxu0 0.0
    %1125 = vmatpush1.xpose.msra.mxu0 0.0
    %1126 = vmatprep.subr.mxu0 0.0
    %1127 = vmatpush1.xpose.msra.mxu0 0.0
    %1128 = vmatprep.subr.mxu0 0.0
    %1129 = vmatpush1.xpose.msra.mxu0 0.0
    %1130 = vmatprep.subr.mxu0 0.0
    %1131 = vmatpush1.xpose.msra.mxu0 0.0
    %1132 = vmatprep.subr.mxu0 0.0
    %1133 = vmatpush1.xpose.msra.mxu0 0.0
    %1134 = vmatprep.subr.mxu0 0.0
    %1135 = vmatpush1.xpose.msra.mxu0 0.0
    %1136 = vmatprep.subr.mxu0 0.0
    %1137 = vmatpush1.xpose.msra.mxu0 0.0
    %1138 = vmatprep.subr.mxu0 0.0
    %1139 = vmatpush1.xpose.msra.mxu0 0.0
    %1140 = vmatprep.subr.mxu0 0.0
    %1141 = vmatpush1.xpose.msra.mxu0 0.0
    %1142 = vmatprep.subr.mxu0 0.0
    %1143 = vmatpush1.xpose.msra.mxu0 0.0
    %1144 = vmatprep.subr.mxu0 0.0
    %1145 = vmatpush1.xpose.msra.mxu0 0.0
    %1146 = vmatprep.subr.mxu0 0.0
    %1147 = vmatpush1.xpose.msra.mxu0 %v1114
    %1148 = vmatprep.subr.mxu0 0.0
    %1149 = vmatpush2.xpose.msra.mxu0 0.0
    %1150 = vmatprep.subr.mxu0 0.0
    %1151 = vmatpush2.xpose.msra.mxu0 0.0
    %1152 = vmatprep.subr.mxu0 0.0
    %1153 = vmatpush2.xpose.msra.mxu0 0.0
    %1154 = vmatprep.subr.mxu0 0.0
    %1155 = vmatpush2.xpose.msra.mxu0 0.0
    %1156 = vmatprep.subr.mxu0 0.0
    %1157 = vmatpush2.xpose.msra.mxu0 0.0
    %1158 = vmatprep.subr.mxu0 0.0
    %1159 = vmatpush2.xpose.msra.mxu0 0.0
    %1160 = vmatprep.subr.mxu0 0.0
    %1161 = vmatpush2.xpose.msra.mxu0 0.0
    %1162 = vmatprep.subr.mxu0 0.0
    %1163 = vmatpush2.xpose.msra.mxu0 0.0
    %1164 = vmatprep.subr.mxu0 0.0
    %1165 = vmatpush2.xpose.msra.mxu0 0.0
    %1166 = vmatprep.subr.mxu0 0.0
    %1167 = vmatpush2.xpose.msra.mxu0 0.0
    %1168 = vmatprep.subr.mxu0 0.0
    %1169 = vmatpush2.xpose.msra.mxu0 0.0
    %1170 = vmatprep.subr.mxu0 0.0
    %1171 = vmatpush2.xpose.msra.mxu0 0.0
    %1172 = vmatprep.subr.mxu0 0.0
    %1173 = vmatpush2.xpose.msra.mxu0 0.0
    %1174 = vmatprep.subr.mxu0 0.0
    %1175 = vmatpush2.xpose.msra.mxu0 0.0
    %1176 = vmatprep.subr.mxu0 0.0
    %1177 = vmatpush2.xpose.msra.mxu0 0.0
    %1178 = vmatprep.subr.mxu0 0.0
    %1179 = vmatpush2.xpose.msra.mxu0 0.0
    %1180 = vmatprep.mubr.f32.mxu0 0.0
    %1181 = vmatmul.mubr.f32.gmra.mxu0 %v1111
    %v1182 = vpop.f32.mrf.mxu0
    %v1183 = vadd.f32 0.0, %v1182
    %v1184 = vpop.f32.mrf.mxu0
    %1185 = vdwg.mxu0
    %v1186 = vsel %vm1109, -1e+10, %v1183
    %v1187 = vsel %vm417, %v1186, -inf
    %1188 = vmax.xlane.f32.xlu0 %v1187
    %v1189 = vpop.xlane.xlu0 %1188
    %v1190 = vsub.f32 %v1186, %v1189
    %v1191 = vmul.f32 %v1190, 1.442695
    %v1192 = vpow.pop %v1191
    %v1193 = vsel %vm417, %v1192, 0.0
    %1194 = vadd.xlane.f32.xlu0 %v1193
    %v1195 = vpop.xlane.xlu0 %1194
    %v1196 = vrcp.pop %v1195
    %v1197 = vmul.f32 %v1192, %v1196
    %v1199 = vsel %vm417, %v1197, 0
    %1201 = vmatprep.subr.mxu0 0.0
    %1202 = vmatpush1.msra.mxu0 0.0
    %1203 = vmatprep.subr.mxu0 0.0
    %1204 = vmatpush1.msra.mxu0 0.0
    %1205 = vmatprep.subr.mxu0 0.0
    %1206 = vmatpush1.msra.mxu0 0.0
    %1207 = vmatprep.subr.mxu0 0.0
    %1208 = vmatpush1.msra.mxu0 0.0
    %1209 = vmatprep.subr.mxu0 0.0
    %1210 = vmatpush1.msra.mxu0 0.0
    %1211 = vmatprep.subr.mxu0 0.0
    %1212 = vmatpush1.msra.mxu0 0.0
    %1213 = vmatprep.subr.mxu0 0.0
    %1214 = vmatpush1.msra.mxu0 0.0
    %1215 = vmatprep.subr.mxu0 0.0
    %1216 = vmatpush1.msra.mxu0 0.0
    %1217 = vmatprep.subr.mxu0 0.0
    %1218 = vmatpush1.msra.mxu0 0.0
    %1219 = vmatprep.subr.mxu0 0.0
    %1220 = vmatpush1.msra.mxu0 0.0
    %1221 = vmatprep.subr.mxu0 0.0
    %1222 = vmatpush1.msra.mxu0 0.0
    %1223 = vmatprep.subr.mxu0 0.0
    %1224 = vmatpush1.msra.mxu0 0.0
    %1225 = vmatprep.subr.mxu0 0.0
    %1226 = vmatpush1.msra.mxu0 0.0
    %1227 = vmatprep.subr.mxu0 0.0
    %1228 = vmatpush1.msra.mxu0 0.0
    %1229 = vmatprep.subr.mxu0 0.0
    %1230 = vmatpush1.msra.mxu0 0.0
    %1231 = vmatprep.subr.mxu0 0.0
    %1232 = vmatpush1.msra.mxu0 %v410
    %1233 = vmatprep.subr.mxu0 0.0
    %1234 = vmatpush2.msra.mxu0 0.0
    %1235 = vmatprep.subr.mxu0 0.0
    %1236 = vmatpush2.msra.mxu0 0.0
    %1237 = vmatprep.subr.mxu0 0.0
    %1238 = vmatpush2.msra.mxu0 0.0
    %1239 = vmatprep.subr.mxu0 0.0
    %1240 = vmatpush2.msra.mxu0 0.0
    %1241 = vmatprep.subr.mxu0 0.0
    %1242 = vmatpush2.msra.mxu0 0.0
    %1243 = vmatprep.subr.mxu0 0.0
    %1244 = vmatpush2.msra.mxu0 0.0
    %1245 = vmatprep.subr.mxu0 0.0
    %1246 = vmatpush2.msra.mxu0 0.0
    %1247 = vmatprep.subr.mxu0 0.0
    %1248 = vmatpush2.msra.mxu0 0.0
    %1249 = vmatprep.subr.mxu0 0.0
    %1250 = vmatpush2.msra.mxu0 0.0
    %1251 = vmatprep.subr.mxu0 0.0
    %1252 = vmatpush2.msra.mxu0 0.0
    %1253 = vmatprep.subr.mxu0 0.0
    %1254 = vmatpush2.msra.mxu0 0.0
    %1255 = vmatprep.subr.mxu0 0.0
    %1256 = vmatpush2.msra.mxu0 0.0
    %1257 = vmatprep.subr.mxu0 0.0
    %1258 = vmatpush2.msra.mxu0 0.0
    %1259 = vmatprep.subr.mxu0 0.0
    %1260 = vmatpush2.msra.mxu0 0.0
    %1261 = vmatprep.subr.mxu0 0.0
    %1262 = vmatpush2.msra.mxu0 0.0
    %1263 = vmatprep.subr.mxu0 0.0
    %1264 = vmatpush2.msra.mxu0 0.0
    %1265 = vmatprep.mubr.f32.mxu0 0.0
    %1266 = vmatmul.mubr.f32.gmra.mxu0 %v1199
    %v1267 = vpop.f32.mrf.mxu0
    %v1268 = vadd.f32 0.0, %v1267
    %v1269 = vpop.f32.mrf.mxu0
    %1270 = vdwg.mxu0
    %1271 = vrot.lane.b32.xlu0 %v414, 120
    %v1272 = vpop.permute.xlu0 %1271
    %1273 = vrot.lane.b32.xlu0 %v325, 120
    %v1274 = vpop.permute.xlu0 %1273
    %v1275 = vsel %vm417, %v1272, 0
    %v1277 = vsel %vm417, %v1274, 0
    %1279 = vmatprep.subr.mxu0 0.0
    %1280 = vmatpush1.xpose.msra.mxu0 0.0
    %1281 = vmatprep.subr.mxu0 0.0
    %1282 = vmatpush1.xpose.msra.mxu0 0.0
    %1283 = vmatprep.subr.mxu0 0.0
    %1284 = vmatpush1.xpose.msra.mxu0 0.0
    %1285 = vmatprep.subr.mxu0 0.0
    %1286 = vmatpush1.xpose.msra.mxu0 0.0
    %1287 = vmatprep.subr.mxu0 0.0
    %1288 = vmatpush1.xpose.msra.mxu0 0.0
    %1289 = vmatprep.subr.mxu0 0.0
    %1290 = vmatpush1.xpose.msra.mxu0 0.0
    %1291 = vmatprep.subr.mxu0 0.0
    %1292 = vmatpush1.xpose.msra.mxu0 0.0
    %1293 = vmatprep.subr.mxu0 0.0
    %1294 = vmatpush1.xpose.msra.mxu0 0.0
    %1295 = vmatprep.subr.mxu0 0.0
    %1296 = vmatpush1.xpose.msra.mxu0 0.0
    %1297 = vmatprep.subr.mxu0 0.0
    %1298 = vmatpush1.xpose.msra.mxu0 0.0
    %1299 = vmatprep.subr.mxu0 0.0
    %1300 = vmatpush1.xpose.msra.mxu0 0.0
    %1301 = vmatprep.subr.mxu0 0.0
    %1302 = vmatpush1.xpose.msra.mxu0 0.0
    %1303 = vmatprep.subr.mxu0 0.0
    %1304 = vmatpush1.xpose.msra.mxu0 0.0
    %1305 = vmatprep.subr.mxu0 0.0
    %1306 = vmatpush1.xpose.msra.mxu0 0.0
    %1307 = vmatprep.subr.mxu0 0.0
    %1308 = vmatpush1.xpose.msra.mxu0 0.0
    %1309 = vmatprep.subr.mxu0 0.0
    %1310 = vmatpush1.xpose.msra.mxu0 %v1277
    %1311 = vmatprep.subr.mxu0 0.0
    %1312 = vmatpush2.xpose.msra.mxu0 0.0
    %1313 = vmatprep.subr.mxu0 0.0
    %1314 = vmatpush2.xpose.msra.mxu0 0.0
    %1315 = vmatprep.subr.mxu0 0.0
    %1316 = vmatpush2.xpose.msra.mxu0 0.0
    %1317 = vmatprep.subr.mxu0 0.0
    %1318 = vmatpush2.xpose.msra.mxu0 0.0
    %1319 = vmatprep.subr.mxu0 0.0
    %1320 = vmatpush2.xpose.msra.mxu0 0.0
    %1321 = vmatprep.subr.mxu0 0.0
    %1322 = vmatpush2.xpose.msra.mxu0 0.0
    %1323 = vmatprep.subr.mxu0 0.0
    %1324 = vmatpush2.xpose.msra.mxu0 0.0
    %1325 = vmatprep.subr.mxu0 0.0
    %1326 = vmatpush2.xpose.msra.mxu0 0.0
    %1327 = vmatprep.subr.mxu0 0.0
    %1328 = vmatpush2.xpose.msra.mxu0 0.0
    %1329 = vmatprep.subr.mxu0 0.0
    %1330 = vmatpush2.xpose.msra.mxu0 0.0
    %1331 = vmatprep.subr.mxu0 0.0
    %1332 = vmatpush2.xpose.msra.mxu0 0.0
    %1333 = vmatprep.subr.mxu0 0.0
    %1334 = vmatpush2.xpose.msra.mxu0 0.0
    %1335 = vmatprep.subr.mxu0 0.0
    %1336 = vmatpush2.xpose.msra.mxu0 0.0
    %1337 = vmatprep.subr.mxu0 0.0
    %1338 = vmatpush2.xpose.msra.mxu0 0.0
    %1339 = vmatprep.subr.mxu0 0.0
    %1340 = vmatpush2.xpose.msra.mxu0 0.0
    %1341 = vmatprep.subr.mxu0 0.0
    %1342 = vmatpush2.xpose.msra.mxu0 0.0
    %1343 = vmatprep.mubr.f32.mxu0 0.0
    %1344 = vmatmul.mubr.f32.gmra.mxu0 %v1275
    %v1345 = vpop.f32.mrf.mxu0
    %v1346 = vadd.f32 0.0, %v1345
    %v1347 = vpop.f32.mrf.mxu0
    %1348 = vdwg.mxu0
    %v1349 = vsel %vm1109, -1e+10, %v1346
    %v1350 = vsel %vm417, %v1349, -inf
    %1351 = vmax.xlane.f32.xlu0 %v1350
    %v1352 = vpop.xlane.xlu0 %1351
    %v1353 = vsub.f32 %v1349, %v1352
    %v1354 = vmul.f32 %v1353, 1.442695
    %v1355 = vpow.pop %v1354
    %v1356 = vsel %vm417, %v1355, 0.0
    %1357 = vadd.xlane.f32.xlu0 %v1356
    %v1358 = vpop.xlane.xlu0 %1357
    %v1359 = vrcp.pop %v1358
    %v1360 = vmul.f32 %v1355, %v1359
    %1362 = vrot.lane.b32.xlu0 %v410, 120
    %v1363 = vpop.permute.xlu0 %1362
    %v1366 = vsel %vm417, %v1360, 0
    %1368 = vmatprep.subr.mxu0 0.0
    %1369 = vmatpush1.msra.mxu0 0.0
    %1370 = vmatprep.subr.mxu0 0.0
    %1371 = vmatpush1.msra.mxu0 0.0
    %1372 = vmatprep.subr.mxu0 0.0
    %1373 = vmatpush1.msra.mxu0 0.0
    %1374 = vmatprep.subr.mxu0 0.0
    %1375 = vmatpush1.msra.mxu0 0.0
    %1376 = vmatprep.subr.mxu0 0.0
    %1377 = vmatpush1.msra.mxu0 0.0
    %1378 = vmatprep.subr.mxu0 0.0
    %1379 = vmatpush1.msra.mxu0 0.0
    %1380 = vmatprep.subr.mxu0 0.0
    %1381 = vmatpush1.msra.mxu0 0.0
    %1382 = vmatprep.subr.mxu0 0.0
    %1383 = vmatpush1.msra.mxu0 0.0
    %1384 = vmatprep.subr.mxu0 0.0
    %1385 = vmatpush1.msra.mxu0 0.0
    %1386 = vmatprep.subr.mxu0 0.0
    %1387 = vmatpush1.msra.mxu0 0.0
    %1388 = vmatprep.subr.mxu0 0.0
    %1389 = vmatpush1.msra.mxu0 0.0
    %1390 = vmatprep.subr.mxu0 0.0
    %1391 = vmatpush1.msra.mxu0 0.0
    %1392 = vmatprep.subr.mxu0 0.0
    %1393 = vmatpush1.msra.mxu0 0.0
    %1394 = vmatprep.subr.mxu0 0.0
    %1395 = vmatpush1.msra.mxu0 0.0
    %1396 = vmatprep.subr.mxu0 0.0
    %1397 = vmatpush1.msra.mxu0 0.0
    %1398 = vmatprep.subr.mxu0 0.0
    %1399 = vmatpush1.msra.mxu0 %v1363
    %1400 = vmatprep.subr.mxu0 0.0
    %1401 = vmatpush2.msra.mxu0 0.0
    %1402 = vmatprep.subr.mxu0 0.0
    %1403 = vmatpush2.msra.mxu0 0.0
    %1404 = vmatprep.subr.mxu0 0.0
    %1405 = vmatpush2.msra.mxu0 0.0
    %1406 = vmatprep.subr.mxu0 0.0
    %1407 = vmatpush2.msra.mxu0 0.0
    %1408 = vmatprep.subr.mxu0 0.0
    %1409 = vmatpush2.msra.mxu0 0.0
    %1410 = vmatprep.subr.mxu0 0.0
    %1411 = vmatpush2.msra.mxu0 0.0
    %1412 = vmatprep.subr.mxu0 0.0
    %1413 = vmatpush2.msra.mxu0 0.0
    %1414 = vmatprep.subr.mxu0 0.0
    %1415 = vmatpush2.msra.mxu0 0.0
    %1416 = vmatprep.subr.mxu0 0.0
    %1417 = vmatpush2.msra.mxu0 0.0
    %1418 = vmatprep.subr.mxu0 0.0
    %1419 = vmatpush2.msra.mxu0 0.0
    %1420 = vmatprep.subr.mxu0 0.0
    %1421 = vmatpush2.msra.mxu0 0.0
    %1422 = vmatprep.subr.mxu0 0.0
    %1423 = vmatpush2.msra.mxu0 0.0
    %1424 = vmatprep.subr.mxu0 0.0
    %1425 = vmatpush2.msra.mxu0 0.0
    %1426 = vmatprep.subr.mxu0 0.0
    %1427 = vmatpush2.msra.mxu0 0.0
    %1428 = vmatprep.subr.mxu0 0.0
    %1429 = vmatpush2.msra.mxu0 0.0
    %1430 = vmatprep.subr.mxu0 0.0
    %1431 = vmatpush2.msra.mxu0 0.0
    %1432 = vmatprep.mubr.f32.mxu0 0.0
    %1433 = vmatmul.mubr.f32.gmra.mxu0 %v1366
    %v1434 = vpop.f32.mrf.mxu0
    %v1435 = vadd.f32 0.0, %v1434
    %v1436 = vpop.f32.mrf.mxu0
    %1437 = vdwg.mxu0
    %1438 = vrot.lane.b32.xlu0 %v414, 112
    %v1439 = vpop.permute.xlu0 %1438
    %1440 = vrot.lane.b32.xlu0 %v325, 112
    %v1441 = vpop.permute.xlu0 %1440
    %v1442 = vsel %vm417, %v1439, 0
    %v1444 = vsel %vm417, %v1441, 0
    %1446 = vmatprep.subr.mxu0 0.0
    %1447 = vmatpush1.xpose.msra.mxu0 0.0
    %1448 = vmatprep.subr.mxu0 0.0
    %1449 = vmatpush1.xpose.msra.mxu0 0.0
    %1450 = vmatprep.subr.mxu0 0.0
    %1451 = vmatpush1.xpose.msra.mxu0 0.0
    %1452 = vmatprep.subr.mxu0 0.0
    %1453 = vmatpush1.xpose.msra.mxu0 0.0
    %1454 = vmatprep.subr.mxu0 0.0
    %1455 = vmatpush1.xpose.msra.mxu0 0.0
    %1456 = vmatprep.subr.mxu0 0.0
    %1457 = vmatpush1.xpose.msra.mxu0 0.0
    %1458 = vmatprep.subr.mxu0 0.0
    %1459 = vmatpush1.xpose.msra.mxu0 0.0
    %1460 = vmatprep.subr.mxu0 0.0
    %1461 = vmatpush1.xpose.msra.mxu0 0.0
    %1462 = vmatprep.subr.mxu0 0.0
    %1463 = vmatpush1.xpose.msra.mxu0 0.0
    %1464 = vmatprep.subr.mxu0 0.0
    %1465 = vmatpush1.xpose.msra.mxu0 0.0
    %1466 = vmatprep.subr.mxu0 0.0
    %1467 = vmatpush1.xpose.msra.mxu0 0.0
    %1468 = vmatprep.subr.mxu0 0.0
    %1469 = vmatpush1.xpose.msra.mxu0 0.0
    %1470 = vmatprep.subr.mxu0 0.0
    %1471 = vmatpush1.xpose.msra.mxu0 0.0
    %1472 = vmatprep.subr.mxu0 0.0
    %1473 = vmatpush1.xpose.msra.mxu0 0.0
    %1474 = vmatprep.subr.mxu0 0.0
    %1475 = vmatpush1.xpose.msra.mxu0 0.0
    %1476 = vmatprep.subr.mxu0 0.0
    %1477 = vmatpush1.xpose.msra.mxu0 %v1444
    %1478 = vmatprep.subr.mxu0 0.0
    %1479 = vmatpush2.xpose.msra.mxu0 0.0
    %1480 = vmatprep.subr.mxu0 0.0
    %1481 = vmatpush2.xpose.msra.mxu0 0.0
    %1482 = vmatprep.subr.mxu0 0.0
    %1483 = vmatpush2.xpose.msra.mxu0 0.0
    %1484 = vmatprep.subr.mxu0 0.0
    %1485 = vmatpush2.xpose.msra.mxu0 0.0
    %1486 = vmatprep.subr.mxu0 0.0
    %1487 = vmatpush2.xpose.msra.mxu0 0.0
    %1488 = vmatprep.subr.mxu0 0.0
    %1489 = vmatpush2.xpose.msra.mxu0 0.0
    %1490 = vmatprep.subr.mxu0 0.0
    %1491 = vmatpush2.xpose.msra.mxu0 0.0
    %1492 = vmatprep.subr.mxu0 0.0
    %1493 = vmatpush2.xpose.msra.mxu0 0.0
    %1494 = vmatprep.subr.mxu0 0.0
    %1495 = vmatpush2.xpose.msra.mxu0 0.0
    %1496 = vmatprep.subr.mxu0 0.0
    %1497 = vmatpush2.xpose.msra.mxu0 0.0
    %1498 = vmatprep.subr.mxu0 0.0
    %1499 = vmatpush2.xpose.msra.mxu0 0.0
    %1500 = vmatprep.subr.mxu0 0.0
    %1501 = vmatpush2.xpose.msra.mxu0 0.0
    %1502 = vmatprep.subr.mxu0 0.0
    %1503 = vmatpush2.xpose.msra.mxu0 0.0
    %1504 = vmatprep.subr.mxu0 0.0
    %1505 = vmatpush2.xpose.msra.mxu0 0.0
    %1506 = vmatprep.subr.mxu0 0.0
    %1507 = vmatpush2.xpose.msra.mxu0 0.0
    %1508 = vmatprep.subr.mxu0 0.0
    %1509 = vmatpush2.xpose.msra.mxu0 0.0
    %1510 = vmatprep.mubr.f32.mxu0 0.0
    %1511 = vmatmul.mubr.f32.gmra.mxu0 %v1442
    %v1512 = vpop.f32.mrf.mxu0
    %v1513 = vadd.f32 0.0, %v1512
    %v1514 = vpop.f32.mrf.mxu0
    %1515 = vdwg.mxu0
    %v1516 = vsel %vm1109, -1e+10, %v1513
    %v1517 = vsel %vm417, %v1516, -inf
    %1518 = vmax.xlane.f32.xlu0 %v1517
    %v1519 = vpop.xlane.xlu0 %1518
    %v1520 = vsub.f32 %v1516, %v1519
    %v1521 = vmul.f32 %v1520, 1.442695
    %v1522 = vpow.pop %v1521
    %v1523 = vsel %vm417, %v1522, 0.0
    %1524 = vadd.xlane.f32.xlu0 %v1523
    %v1525 = vpop.xlane.xlu0 %1524
    %v1526 = vrcp.pop %v1525
    %v1527 = vmul.f32 %v1522, %v1526
    %1528 = vrot.lane.b32.xlu0 %v410, 112
    %v1529 = vpop.permute.xlu0 %1528
    %v1532 = vsel %vm417, %v1527, 0
    %1534 = vmatprep.subr.mxu0 0.0
    %1535 = vmatpush1.msra.mxu0 0.0
    %1536 = vmatprep.subr.mxu0 0.0
    %1537 = vmatpush1.msra.mxu0 0.0
    %1538 = vmatprep.subr.mxu0 0.0
    %1539 = vmatpush1.msra.mxu0 0.0
    %1540 = vmatprep.subr.mxu0 0.0
    %1541 = vmatpush1.msra.mxu0 0.0
    %1542 = vmatprep.subr.mxu0 0.0
    %1543 = vmatpush1.msra.mxu0 0.0
    %1544 = vmatprep.subr.mxu0 0.0
    %1545 = vmatpush1.msra.mxu0 0.0
    %1546 = vmatprep.subr.mxu0 0.0
    %1547 = vmatpush1.msra.mxu0 0.0
    %1548 = vmatprep.subr.mxu0 0.0
    %1549 = vmatpush1.msra.mxu0 0.0
    %1550 = vmatprep.subr.mxu0 0.0
    %1551 = vmatpush1.msra.mxu0 0.0
    %1552 = vmatprep.subr.mxu0 0.0
    %1553 = vmatpush1.msra.mxu0 0.0
    %1554 = vmatprep.subr.mxu0 0.0
    %1555 = vmatpush1.msra.mxu0 0.0
    %1556 = vmatprep.subr.mxu0 0.0
    %1557 = vmatpush1.msra.mxu0 0.0
    %1558 = vmatprep.subr.mxu0 0.0
    %1559 = vmatpush1.msra.mxu0 0.0
    %1560 = vmatprep.subr.mxu0 0.0
    %1561 = vmatpush1.msra.mxu0 0.0
    %1562 = vmatprep.subr.mxu0 0.0
    %1563 = vmatpush1.msra.mxu0 0.0
    %1564 = vmatprep.subr.mxu0 0.0
    %1565 = vmatpush1.msra.mxu0 %v1529
    %1566 = vmatprep.subr.mxu0 0.0
    %1567 = vmatpush2.msra.mxu0 0.0
    %1568 = vmatprep.subr.mxu0 0.0
    %1569 = vmatpush2.msra.mxu0 0.0
    %1570 = vmatprep.subr.mxu0 0.0
    %1571 = vmatpush2.msra.mxu0 0.0
    %1572 = vmatprep.subr.mxu0 0.0
    %1573 = vmatpush2.msra.mxu0 0.0
    %1574 = vmatprep.subr.mxu0 0.0
    %1575 = vmatpush2.msra.mxu0 0.0
    %1576 = vmatprep.subr.mxu0 0.0
    %1577 = vmatpush2.msra.mxu0 0.0
    %1578 = vmatprep.subr.mxu0 0.0
    %1579 = vmatpush2.msra.mxu0 0.0
    %1580 = vmatprep.subr.mxu0 0.0
    %1581 = vmatpush2.msra.mxu0 0.0
    %1582 = vmatprep.subr.mxu0 0.0
    %1583 = vmatpush2.msra.mxu0 0.0
    %1584 = vmatprep.subr.mxu0 0.0
    %1585 = vmatpush2.msra.mxu0 0.0
    %1586 = vmatprep.subr.mxu0 0.0
    %1587 = vmatpush2.msra.mxu0 0.0
    %1588 = vmatprep.subr.mxu0 0.0
    %1589 = vmatpush2.msra.mxu0 0.0
    %1590 = vmatprep.subr.mxu0 0.0
    %1591 = vmatpush2.msra.mxu0 0.0
    %1592 = vmatprep.subr.mxu0 0.0
    %1593 = vmatpush2.msra.mxu0 0.0
    %1594 = vmatprep.subr.mxu0 0.0
    %1595 = vmatpush2.msra.mxu0 0.0
    %1596 = vmatprep.subr.mxu0 0.0
    %1597 = vmatpush2.msra.mxu0 0.0
    %1598 = vmatprep.mubr.f32.mxu0 0.0
    %1599 = vmatmul.mubr.f32.gmra.mxu0 %v1532
    %v1600 = vpop.f32.mrf.mxu0
    %v1601 = vadd.f32 0.0, %v1600
    %v1602 = vpop.f32.mrf.mxu0
    %1603 = vdwg.mxu0
    %1604 = vrot.lane.b32.xlu0 %v414, 104
    %v1605 = vpop.permute.xlu0 %1604
    %1606 = vrot.lane.b32.xlu0 %v325, 104
    %v1607 = vpop.permute.xlu0 %1606
    %v1608 = vsel %vm417, %v1605, 0
    %v1610 = vsel %vm417, %v1607, 0
    %1612 = vmatprep.subr.mxu0 0.0
    %1613 = vmatpush1.xpose.msra.mxu0 0.0
    %1614 = vmatprep.subr.mxu0 0.0
    %1615 = vmatpush1.xpose.msra.mxu0 0.0
    %1616 = vmatprep.subr.mxu0 0.0
    %1617 = vmatpush1.xpose.msra.mxu0 0.0
    %1618 = vmatprep.subr.mxu0 0.0
    %1619 = vmatpush1.xpose.msra.mxu0 0.0
    %1620 = vmatprep.subr.mxu0 0.0
    %1621 = vmatpush1.xpose.msra.mxu0 0.0
    %1622 = vmatprep.subr.mxu0 0.0
    %1623 = vmatpush1.xpose.msra.mxu0 0.0
    %1624 = vmatprep.subr.mxu0 0.0
    %1625 = vmatpush1.xpose.msra.mxu0 0.0
    %1626 = vmatprep.subr.mxu0 0.0
    %1627 = vmatpush1.xpose.msra.mxu0 0.0
    %1628 = vmatprep.subr.mxu0 0.0
    %1629 = vmatpush1.xpose.msra.mxu0 0.0
    %1630 = vmatprep.subr.mxu0 0.0
    %1631 = vmatpush1.xpose.msra.mxu0 0.0
    %1632 = vmatprep.subr.mxu0 0.0
    %1633 = vmatpush1.xpose.msra.mxu0 0.0
    %1634 = vmatprep.subr.mxu0 0.0
    %1635 = vmatpush1.xpose.msra.mxu0 0.0
    %1636 = vmatprep.subr.mxu0 0.0
    %1637 = vmatpush1.xpose.msra.mxu0 0.0
    %1638 = vmatprep.subr.mxu0 0.0
    %1639 = vmatpush1.xpose.msra.mxu0 0.0
    %1640 = vmatprep.subr.mxu0 0.0
    %1641 = vmatpush1.xpose.msra.mxu0 0.0
    %1642 = vmatprep.subr.mxu0 0.0
    %1643 = vmatpush1.xpose.msra.mxu0 %v1610
    %1644 = vmatprep.subr.mxu0 0.0
    %1645 = vmatpush2.xpose.msra.mxu0 0.0
    %1646 = vmatprep.subr.mxu0 0.0
    %1647 = vmatpush2.xpose.msra.mxu0 0.0
    %1648 = vmatprep.subr.mxu0 0.0
    %1649 = vmatpush2.xpose.msra.mxu0 0.0
    %1650 = vmatprep.subr.mxu0 0.0
    %1651 = vmatpush2.xpose.msra.mxu0 0.0
    %1652 = vmatprep.subr.mxu0 0.0
    %1653 = vmatpush2.xpose.msra.mxu0 0.0
    %1654 = vmatprep.subr.mxu0 0.0
    %1655 = vmatpush2.xpose.msra.mxu0 0.0
    %1656 = vmatprep.subr.mxu0 0.0
    %1657 = vmatpush2.xpose.msra.mxu0 0.0
    %1658 = vmatprep.subr.mxu0 0.0
    %1659 = vmatpush2.xpose.msra.mxu0 0.0
    %1660 = vmatprep.subr.mxu0 0.0
    %1661 = vmatpush2.xpose.msra.mxu0 0.0
    %1662 = vmatprep.subr.mxu0 0.0
    %1663 = vmatpush2.xpose.msra.mxu0 0.0
    %1664 = vmatprep.subr.mxu0 0.0
    %1665 = vmatpush2.xpose.msra.mxu0 0.0
    %1666 = vmatprep.subr.mxu0 0.0
    %1667 = vmatpush2.xpose.msra.mxu0 0.0
    %1668 = vmatprep.subr.mxu0 0.0
    %1669 = vmatpush2.xpose.msra.mxu0 0.0
    %1670 = vmatprep.subr.mxu0 0.0
    %1671 = vmatpush2.xpose.msra.mxu0 0.0
    %1672 = vmatprep.subr.mxu0 0.0
    %1673 = vmatpush2.xpose.msra.mxu0 0.0
    %1674 = vmatprep.subr.mxu0 0.0
    %1675 = vmatpush2.xpose.msra.mxu0 0.0
    %1676 = vmatprep.mubr.f32.mxu0 0.0
    %1677 = vmatmul.mubr.f32.gmra.mxu0 %v1608
    %v1678 = vpop.f32.mrf.mxu0
    %v1679 = vadd.f32 0.0, %v1678
    %v1680 = vpop.f32.mrf.mxu0
    %1681 = vdwg.mxu0
    %v1682 = vsel %vm1109, -1e+10, %v1679
    %v1683 = vsel %vm417, %v1682, -inf
    %1684 = vmax.xlane.f32.xlu0 %v1683
    %v1685 = vpop.xlane.xlu0 %1684
    %v1686 = vsub.f32 %v1682, %v1685
    %v1687 = vmul.f32 %v1686, 1.442695
    %v1688 = vpow.pop %v1687
    %v1689 = vsel %vm417, %v1688, 0.0
    %1690 = vadd.xlane.f32.xlu0 %v1689
    %v1691 = vpop.xlane.xlu0 %1690
    %v1692 = vrcp.pop %v1691
    %v1693 = vmul.f32 %v1688, %v1692
    %1694 = vrot.lane.b32.xlu0 %v410, 104
    %v1695 = vpop.permute.xlu0 %1694
    %v1698 = vsel %vm417, %v1693, 0
    %1700 = vmatprep.subr.mxu0 0.0
    %1701 = vmatpush1.msra.mxu0 0.0
    %1702 = vmatprep.subr.mxu0 0.0
    %1703 = vmatpush1.msra.mxu0 0.0
    %1704 = vmatprep.subr.mxu0 0.0
    %1705 = vmatpush1.msra.mxu0 0.0
    %1706 = vmatprep.subr.mxu0 0.0
    %1707 = vmatpush1.msra.mxu0 0.0
    %1708 = vmatprep.subr.mxu0 0.0
    %1709 = vmatpush1.msra.mxu0 0.0
    %1710 = vmatprep.subr.mxu0 0.0
    %1711 = vmatpush1.msra.mxu0 0.0
    %1712 = vmatprep.subr.mxu0 0.0
    %1713 = vmatpush1.msra.mxu0 0.0
    %1714 = vmatprep.subr.mxu0 0.0
    %1715 = vmatpush1.msra.mxu0 0.0
    %1716 = vmatprep.subr.mxu0 0.0
    %1717 = vmatpush1.msra.mxu0 0.0
    %1718 = vmatprep.subr.mxu0 0.0
    %1719 = vmatpush1.msra.mxu0 0.0
    %1720 = vmatprep.subr.mxu0 0.0
    %1721 = vmatpush1.msra.mxu0 0.0
    %1722 = vmatprep.subr.mxu0 0.0
    %1723 = vmatpush1.msra.mxu0 0.0
    %1724 = vmatprep.subr.mxu0 0.0
    %1725 = vmatpush1.msra.mxu0 0.0
    %1726 = vmatprep.subr.mxu0 0.0
    %1727 = vmatpush1.msra.mxu0 0.0
    %1728 = vmatprep.subr.mxu0 0.0
    %1729 = vmatpush1.msra.mxu0 0.0
    %1730 = vmatprep.subr.mxu0 0.0
    %1731 = vmatpush1.msra.mxu0 %v1695
    %1732 = vmatprep.subr.mxu0 0.0
    %1733 = vmatpush2.msra.mxu0 0.0
    %1734 = vmatprep.subr.mxu0 0.0
    %1735 = vmatpush2.msra.mxu0 0.0
    %1736 = vmatprep.subr.mxu0 0.0
    %1737 = vmatpush2.msra.mxu0 0.0
    %1738 = vmatprep.subr.mxu0 0.0
    %1739 = vmatpush2.msra.mxu0 0.0
    %1740 = vmatprep.subr.mxu0 0.0
    %1741 = vmatpush2.msra.mxu0 0.0
    %1742 = vmatprep.subr.mxu0 0.0
    %1743 = vmatpush2.msra.mxu0 0.0
    %1744 = vmatprep.subr.mxu0 0.0
    %1745 = vmatpush2.msra.mxu0 0.0
    %1746 = vmatprep.subr.mxu0 0.0
    %1747 = vmatpush2.msra.mxu0 0.0
    %1748 = vmatprep.subr.mxu0 0.0
    %1749 = vmatpush2.msra.mxu0 0.0
    %1750 = vmatprep.subr.mxu0 0.0
    %1751 = vmatpush2.msra.mxu0 0.0
    %1752 = vmatprep.subr.mxu0 0.0
    %1753 = vmatpush2.msra.mxu0 0.0
    %1754 = vmatprep.subr.mxu0 0.0
    %1755 = vmatpush2.msra.mxu0 0.0
    %1756 = vmatprep.subr.mxu0 0.0
    %1757 = vmatpush2.msra.mxu0 0.0
    %1758 = vmatprep.subr.mxu0 0.0
    %1759 = vmatpush2.msra.mxu0 0.0
    %1760 = vmatprep.subr.mxu0 0.0
    %1761 = vmatpush2.msra.mxu0 0.0
    %1762 = vmatprep.subr.mxu0 0.0
    %1763 = vmatpush2.msra.mxu0 0.0
    %1764 = vmatprep.mubr.f32.mxu0 0.0
    %1765 = vmatmul.mubr.f32.gmra.mxu0 %v1698
    %v1766 = vpop.f32.mrf.mxu0
    %v1767 = vadd.f32 0.0, %v1766
    %v1768 = vpop.f32.mrf.mxu0
    %1769 = vdwg.mxu0
    %1771 = vrot.lane.b32.xlu0 %v1435, 8
    %v1772 = vpop.permute.xlu0 %1771
    %1775 = vrot.lane.b32.xlu0 %v1601, 16
    %v1776 = vpop.permute.xlu0 %1775
    %1779 = vrot.lane.b32.xlu0 %v1767, 24
    %v1780 = vpop.permute.xlu0 %1779
    %v1782 = vsel %vm417, %v1268, %v1772
    %v1783 = vsel %vm1091, %v1782, %v1776
    %v1784 = vsel %vm1093, %v1783, %v1780
    %1785 = vrot.lane.b32.xlu0 %v1360, 8
    %v1786 = vpop.permute.xlu0 %1785
    %1788 = vrot.lane.b32.xlu0 %v1527, 16
    %v1789 = vpop.permute.xlu0 %1788
    %1791 = vrot.lane.b32.xlu0 %v1693, 24
    %v1792 = vpop.permute.xlu0 %1791
    %v1794 = vsel %vm417, %v1197, %v1786
    %v1795 = vsel %vm1091, %v1794, %v1789
    %v1796 = vsel %vm1093, %v1795, %v1792
    %1797 = vst.msk [vmem:[#allocation17] sm:$0xff] %vm161, %v1106
    %1798 = vst.msk [vmem:[#allocation17 + $0x8] sm:$0xff] %vm161, %v1796
    %v1799 = vld [vmem:[#allocation14] sm:$0xff]
    %v1800 = vld [vmem:[#allocation14 + $0x8] sm:$0xff]
    %v1801 = vld [vmem:[#allocation14 + $0x10] sm:$0xff]
    %v1802 = vld [vmem:[#allocation14 + $0x18] sm:$0xff]
    %v1803 = vld [vmem:[%s8] sm:$0x1]
    %v1805 = vlaneseq
    %v1806 = vshrl.u32 %v1805, 7
    %v1807 = vsub.s32 0, %v1806
    %v1808 = vrot.slane %v1803, %v1807
    %v1811 = vsel %vm161, %v1094, 0
    %v1814 = vsel %vm161, %v1784, 0
    %1816 = vmatprep.subr.mxu0 0.0
    %1817 = vmatpush1.msra.mxu0 0.0
    %1818 = vmatprep.subr.mxu0 0.0
    %1819 = vmatpush1.msra.mxu0 0.0
    %1820 = vmatprep.subr.mxu0 0.0
    %1821 = vmatpush1.msra.mxu0 0.0
    %1822 = vmatprep.subr.mxu0 0.0
    %1823 = vmatpush1.msra.mxu0 0.0
    %1824 = vmatprep.subr.mxu0 0.0
    %1825 = vmatpush1.msra.mxu0 0.0
    %1826 = vmatprep.subr.mxu0 0.0
    %1827 = vmatpush1.msra.mxu0 0.0
    %1828 = vmatprep.subr.mxu0 0.0
    %1829 = vmatpush1.msra.mxu0 0.0
    %1830 = vmatprep.subr.mxu0 0.0
    %1831 = vmatpush1.msra.mxu0 0.0
    %1832 = vmatprep.subr.mxu0 0.0
    %1833 = vmatpush1.msra.mxu0 0.0
    %1834 = vmatprep.subr.mxu0 0.0
    %1835 = vmatpush1.msra.mxu0 0.0
    %1836 = vmatprep.subr.mxu0 0.0
    %1837 = vmatpush1.msra.mxu0 0.0
    %1838 = vmatprep.subr.mxu0 0.0
    %1839 = vmatpush1.msra.mxu0 0.0
    %1840 = vmatprep.subr.mxu0 0.0
    %1841 = vmatpush1.msra.mxu0 %v1802
    %1842 = vmatprep.subr.mxu0 0.0
    %1843 = vmatpush1.msra.mxu0 %v1801
    %1844 = vmatprep.subr.mxu0 0.0
    %1845 = vmatpush1.msra.mxu0 %v1800
    %1846 = vmatprep.subr.mxu0 0.0
    %1847 = vmatpush1.msra.mxu0 %v1799
    %1848 = vmatprep.subr.mxu0 0.0
    %1849 = vmatpush2.msra.mxu0 0.0
    %1850 = vmatprep.subr.mxu0 0.0
    %1851 = vmatpush2.msra.mxu0 0.0
    %1852 = vmatprep.subr.mxu0 0.0
    %1853 = vmatpush2.msra.mxu0 0.0
    %1854 = vmatprep.subr.mxu0 0.0
    %1855 = vmatpush2.msra.mxu0 0.0
    %1856 = vmatprep.subr.mxu0 0.0
    %1857 = vmatpush2.msra.mxu0 0.0
    %1858 = vmatprep.subr.mxu0 0.0
    %1859 = vmatpush2.msra.mxu0 0.0
    %1860 = vmatprep.subr.mxu0 0.0
    %1861 = vmatpush2.msra.mxu0 0.0
    %1862 = vmatprep.subr.mxu0 0.0
    %1863 = vmatpush2.msra.mxu0 0.0
    %1864 = vmatprep.subr.mxu0 0.0
    %1865 = vmatpush2.msra.mxu0 0.0
    %1866 = vmatprep.subr.mxu0 0.0
    %1867 = vmatpush2.msra.mxu0 0.0
    %1868 = vmatprep.subr.mxu0 0.0
    %1869 = vmatpush2.msra.mxu0 0.0
    %1870 = vmatprep.subr.mxu0 0.0
    %1871 = vmatpush2.msra.mxu0 0.0
    %1872 = vmatprep.subr.mxu0 0.0
    %1873 = vmatpush2.msra.mxu0 0.0
    %1874 = vmatprep.subr.mxu0 0.0
    %1875 = vmatpush2.msra.mxu0 0.0
    %1876 = vmatprep.subr.mxu0 0.0
    %1877 = vmatpush2.msra.mxu0 0.0
    %1878 = vmatprep.subr.mxu0 0.0
    %1879 = vmatpush2.msra.mxu0 0.0
    %1880 = vmatprep.mubr.f32.mxu0 0.0
    %1881 = vmatmul.mubr.f32.gmra.mxu0 %v1811
    %v1882 = vpop.f32.mrf.mxu0
    %v1883 = vadd.f32 %v1808, %v1882
    %v1884 = vpop.f32.mrf.mxu0
    %1885 = vmatprep.mubr.f32.mxu0 0.0
    %1886 = vmatmul.mubr.f32.gmra.mxu0 %v1814
    %v1887 = vpop.f32.mrf.mxu0
    %v1888 = vadd.f32 %v1808, %v1887
    %v1889 = vpop.f32.mrf.mxu0
    %1890 = vdwg.mxu0
    %v1891 = vsel %vm161, %v1883, 0.0
    %1892 = vadd.xlane.f32.xlu0 %v1891
    %v1893 = vpop.xlane.xlu0 %1892
    %v1894 = vsel %vm161, %v1888, 0.0
    %1895 = vadd.xlane.f32.xlu0 %v1894
    %v1896 = vpop.xlane.xlu0 %1895
    %v1897 = vrcp.pop 32.0
    %v1898 = vmul.f32 %v1893, %v1897
    %v1899 = vmul.f32 %v1896, %v1897
    %v1900 = vsub.f32 %v1883, %v1898
    %v1901 = vsub.f32 %v1888, %v1899
    %v1902 = vmul.f32 %v1900, %v1900
    %v1903 = vmul.f32 %v1901, %v1901
    %v1904 = vsel %vm161, %v1902, 0.0
    %1905 = vadd.xlane.f32.xlu0 %v1904
    %v1906 = vpop.xlane.xlu0 %1905
    %v1907 = vsel %vm161, %v1903, 0.0
    %1908 = vadd.xlane.f32.xlu0 %v1907
    %v1909 = vpop.xlane.xlu0 %1908
    %v1910 = vmul.f32 %v1906, %v1897
    %v1911 = vmul.f32 %v1909, %v1897
    %v1912 = vadd.f32 %v1910, 1e-05
    %v1913 = vadd.f32 %v1911, 1e-05
    %v1914 = vrsqrt.pop %v1912
    %v1915 = vrsqrt.pop %v1913
    %v1916 = vmul.f32 %v1900, %v1914
    %v1917 = vmul.f32 %v1901, %v1915
    %v1918 = vld [vmem:[%s9] sm:$0x1]
    %v1920 = vlaneseq
    %v1921 = vshrl.u32 %v1920, 7
    %v1922 = vsub.s32 0, %v1921
    %v1923 = vrot.slane %v1918, %v1922
    %v1925 = vmul.f32 %v1916, %v1923
    %v1926 = vmul.f32 %v1917, %v1923
    %v1927 = vld [vmem:[%s10] sm:$0x1]
    %v1929 = vlaneseq
    %v1930 = vshrl.u32 %v1929, 7
    %v1931 = vsub.s32 0, %v1930
    %v1932 = vrot.slane %v1927, %v1931
    %v1934 = vadd.f32 %v1925, %v1932
    %v1935 = vadd.f32 %v1926, %v1932
    %1936 = vst.msk [vmem:[#allocation16] sm:$0xff] %vm161, %v1934
    %1937 = vst.msk [vmem:[#allocation16 + $0x8] sm:$0xff] %vm161, %v1935
    // Predicated region
    $region78: #{tpu_custom_call.1} parent=1 // pred_check
      _
    $region79: #{tpu_custom_call.1} parent=1 // pred_check_branch
      %1939 = sbr.rel (0) target = $region81
    $region80: #{tpu_custom_call.1} parent=1 // pred_region
      %s1941 = ssub.s32 256, 256
      %1942 = vsyncadd [#allocation4], %s1941
      %s1943 = sshll.u32 [#allocation16], 4
      %s1944 = int_to_ptr.vmem [resolvable:$true] %s1943
      %1949 = dma.vmem_to_hbm [thread:$0]  %s1944, 256, %s11, [#allocation4], 128, 128, 8
    $region81: #{tpu_custom_call.1} parent=1 // pred_fallthru
      _
    // Predicated region
    $region82: #{tpu_custom_call.1} parent=1 // pred_check
      _
    $region83: #{tpu_custom_call.1} parent=1 // pred_check_branch
      %1951 = sbr.rel (0) target = $region85
    $region84: #{tpu_custom_call.1} parent=1 // pred_region
      %s1953 = ssub.s32 256, 256
      %1954 = vsyncadd [#allocation18], %s1953
      %s1955 = sshll.u32 [#allocation17], 4
      %s1956 = int_to_ptr.vmem [resolvable:$true] %s1955
      %1961 = dma.vmem_to_hbm [thread:$0]  %s1956, 256, %s12, [#allocation18], 128, 128, 8
    $region85: #{tpu_custom_call.1} parent=1 // pred_fallthru
      _
    // Predicated region
    $region86: #{tpu_custom_call.1} parent=1 // pred_check
      _
    $region87: #{tpu_custom_call.1} parent=1 // pred_check_branch
      %1963 = sbr.rel (0) target = $region89
    $region88: #{tpu_custom_call.1} parent=1 // pred_region
      %1964 = dma.done [#allocation4], 256
    $region89: #{tpu_custom_call.1} parent=1 // pred_fallthru
      _
    // Predicated region
    $region90: #{tpu_custom_call.1} parent=1 // pred_check
      _
    $region91: #{tpu_custom_call.1} parent=1 // pred_check_branch
      %1966 = sbr.rel (0) target = $region93
    $region92: #{tpu_custom_call.1} parent=1 // pred_region
      %1967 = dma.done [#allocation18], 256
    $region93: #{tpu_custom_call.1} parent=1 // pred_fallthru
      _
    %1968 = vsyncpa [#allocation3], 1
    %1969 = vsyncpa [#allocation6], 1
    %1970 = vsyncpa [#allocation9], 1
    %1971 = vsyncpa [#allocation12], 1
    %1972 = vsyncpa [#allocation15], 1
    %1973 = vsyncpa [#allocation4], 1
    %1974 = vsyncpa [#allocation18], 1

</llo_original>
